<compile_context>
chip_gen: v5e
topology: v5e:2x2
jax: 0.10.0
libtpu: 0.0.40
codegen_flags: <defaults>
</compile_context>

<pallas_src>
import jax
import jax.numpy as jnp
from jax.experimental import pallas as pl
from jax.experimental.pallas import tpu as pltpu

EPS = 1e-5  # PyTorch BatchNorm1d default eps


# ------------------------------ Pallas kernel -------------------------------

def decoder_kernel(zb_ref, w1_ref, w2_ref, w3_ref, w4_ref,
                   g1_ref, b1_ref, g2_ref, b2_ref, g3_ref, b3_ref,
                   fcw_ref, fcb_ref, o_ref):
    n = o_ref.shape[1]                 # batch; samples interleaved on lanes
    lanes = zb_ref.shape[1]            # 10 * n  (10 positions per phase stream)
    t_len = lanes // n                 # 10
    nz2 = fcb_ref.shape[0]

    def mdot(w, x):
        # MXU: bf16 operands (weights pre-cast in prepare_params), f32 accum.
        return jnp.dot(w, x.astype(jnp.bfloat16),
                       preferred_element_type=jnp.float32)

    def shift_r(x):
        # within-stream shift: element t picks up element t-1 (zero at t=0)
        return jnp.concatenate(
            [jnp.zeros_like(x[:, :n]), x[:, :lanes - n]], axis=1)

    def shift_l(x):
        # within-stream shift: element t picks up element t+1 (zero at t=T-1)
        return jnp.concatenate(
            [x[:, n:], jnp.zeros_like(x[:, :n])], axis=1)

    def bn_relu(a, s, g_ref, bb_ref):
        # BatchNorm1d (training-mode batch stats over samples*positions) + ReLU
        # on a stream-stacked activation a of shape (s*C, 10*n); channel c
        # lives in rows {blk*C + c}.  Stats from per-block lane partial sums.
        c = g_ref.shape[0]
        cnt = float(s * lanes)
        lsum = jnp.sum(a, axis=1, keepdims=True)
        lsq = jnp.sum(a * a, axis=1, keepdims=True)
        ssum, ssq = lsum[:c], lsq[:c]
        for blk in range(1, s):
            ssum = ssum + lsum[blk * c:(blk + 1) * c]
            ssq = ssq + lsq[blk * c:(blk + 1) * c]
        mean = ssum / cnt
        var = jnp.maximum(ssq / cnt - mean * mean, 0.0)   # clamp (no rsqrt(neg))
        scale = g_ref[...] * jax.lax.rsqrt(var + EPS)
        shift = bb_ref[...] - mean * scale
        if s > 1:
            scale = jnp.concatenate([scale] * s, axis=0)
            shift = jnp.concatenate([shift] * s, axis=0)
        return jnp.maximum(a * scale + shift, 0.0)

    def deconv_s2(a, w_ref, s, c_out):
        # ConvTranspose1d(k=4, stride=2, pad=1) on a stream-stacked activation:
        # one MXU push with the block-diag tap-stacked weight, then row-block
        # adds.  Polyphase:  y[2p] = W1 x[p] + W3 x[p-1],
        #                    y[2p+1] = W2 x[p] + W0 x[p+1].
        p = mdot(w_ref[...], a)                     # (s*4*c_out, 10n)

        def tap(b, k):                              # tap-k rows of input stream b
            base = (b * 4 + k) * c_out
            return p[base:base + c_out, :]

        blocks = []
        for b in range(s):
            prev3 = tap(b - 1, 3) if b > 0 else shift_r(tap(s - 1, 3))
            next0 = tap(b + 1, 0) if b < s - 1 else shift_l(tap(0, 0))
            blocks.append(tap(b, 1) + prev3)        # output stream 2b
            blocks.append(tap(b, 2) + next0)        # output stream 2b + 1
        return jnp.concatenate(blocks, axis=0)      # (2*s*c_out, 10n)

    c2 = w2_ref.shape[0] // 4          # 2*ngf
    c3 = w3_ref.shape[0] // 8          # ngf
    c4 = w4_ref.shape[0] // 16         # 1

    # deconv1 (k=10, s=1, p=0) on the length-1 latent: a single matmul against
    # the block-diag replicated latent (wrapper-built), contraction 10*nz_m.
    a1 = bn_relu(mdot(w1_ref[...], zb_ref[...]), 1, g1_ref, b1_ref)   # (4ngf,10n)
    a2 = bn_relu(deconv_s2(a1, w2_ref, 1, c2), 2, g2_ref, b2_ref)     # (2*2ngf,10n)
    a3 = bn_relu(deconv_s2(a2, w3_ref, 2, c3), 4, g3_ref, b3_ref)     # (4*ngf,10n)
    x4 = jnp.tanh(deconv_s2(a3, w4_ref, 4, c4))                       # (8, 10n)
    x4 = x4.astype(jnp.bfloat16)

    # fc: Linear(80, nz*2).  Position pos = s + 8*t; contraction over the 8
    # stream rows per t, accumulated over the 10 stream-positions t.
    acc = jnp.zeros((nz2, n), jnp.float32)
    for t in range(t_len):
        acc = acc + jnp.dot(fcw_ref[t], x4[:, t * n:(t + 1) * n],
                            preferred_element_type=jnp.float32)
    o_ref[...] = acc + fcb_ref[...]                                   # (nz2, n)


# --------------------------- one-time weight prep ----------------------------

def prepare_params(params):
    """Hoisted prep: transpose / tap-stack / block-diag / bf16-cast all weights."""
    f32, bf16 = jnp.float32, jnp.bfloat16

    def stacked(w):                     # (C_in, C_out, 4) -> (4*C_out, C_in)
        cin, cout, k = w.shape
        return jnp.transpose(w, (2, 1, 0)).reshape(k * cout, cin)

    nz_m, c1, k1 = params["w1"].shape   # (nz_m, 4*ngf, 10)
    nz2 = params["fc_w"].shape[0]
    return {
        # deconv1: W1B[c, t*nz_m + i] = w1[i, c, t]     -> (4ngf, 10*nz_m)
        "w1": jnp.transpose(params["w1"], (1, 2, 0)).reshape(c1, k1 * nz_m).astype(bf16),
        # stride-2 layers: block-diag(tap-stacked) over the S input streams
        "w2": stacked(params["w2"]).astype(bf16),                                 # S=1
        "w3": jnp.kron(jnp.eye(2, dtype=f32), stacked(params["w3"])).astype(bf16),  # S=2
        "w4": jnp.kron(jnp.eye(4, dtype=f32), stacked(params["w4"])).astype(bf16),  # S=4
        "g1": params["g1"][:, None].astype(f32), "b1": params["b1"][:, None].astype(f32),
        "g2": params["g2"][:, None].astype(f32), "b2": params["b2"][:, None].astype(f32),
        "g3": params["g3"][:, None].astype(f32), "b3": params["b3"][:, None].astype(f32),
        # fc weight per stream-position t: fcw[t, m, s] = fc_w[m, s + 8*t]
        "fcw": jnp.transpose(params["fc_w"].reshape(nz2, 10, 8), (1, 0, 2)).astype(bf16),
        "fcb": params["fc_b"][:, None].astype(f32),
    }


# -------------------------------- JAX wrapper --------------------------------

def decoder_forward(z, prep):
    """z: (N, nz_m, 1) float32 -> (N, 1, nz*2) float32."""
    n, nz_m, l_in = z.shape
    assert l_in == 1, "Linear(80, .) in Decoder_m forces a length-1 latent input"
    t_len = prep["fcw"].shape[0]        # 10
    nz2 = prep["fcb"].shape[0]

    # Block-diag replicated latent: ZB[t*nz_m + i, t*N + j] = z[j, i]
    # (data-dependent, so built per call; ~6 KB — everything else is hoisted).
    z_t = jnp.transpose(z[:, :, 0])                         # (nz_m, N)
    z_tile = jnp.tile(z_t, (t_len, t_len))                  # (10*nz_m, 10*N)
    rblk = jnp.arange(t_len * nz_m)[:, None] // nz_m
    cblk = jnp.arange(t_len * n)[None, :] // n
    zb = jnp.where(rblk == cblk, z_tile, 0.0).astype(jnp.bfloat16)

    vmem = pl.BlockSpec(memory_space=pltpu.MemorySpace.VMEM)
    out_cm = pl.pallas_call(
        decoder_kernel,
        out_shape=jax.ShapeDtypeStruct((nz2, n), jnp.float32),
        in_specs=[vmem] * 13,
        out_specs=vmem,
    )(zb, prep["w1"], prep["w2"], prep["w3"], prep["w4"],
      prep["g1"], prep["b1"], prep["g2"], prep["b2"], prep["g3"], prep["b3"],
      prep["fcw"], prep["fcb"])
    return jnp.transpose(out_cm)[:, None, :]                # (N, 1, nz*2)


# --------------------------- pure-JAX reference ------------------------------

def _ref_deconv_s2(x, w):
    """ConvTranspose1d(k=4, stride=2, pad=1, no bias); x (N,Cin,L), w (Cin,Cout,4)."""
    n, cin, l = x.shape
    cols = []
    for o in range(2 * l):
        acc = None
        for p in range(l):
            k = o + 1 - 2 * p
            if 0 <= k < w.shape[2]:
                term = jnp.einsum('ni,io->no', x[:, :, p], w[:, :, k])
                acc = term if acc is None else acc + term
        cols.append(acc)
    return jnp.stack(cols, axis=-1)


def _ref_bn_relu(x, g, b):
    mean = x.mean(axis=(0, 2), keepdims=True)
    var = x.var(axis=(0, 2), keepdims=True)            # biased, training-mode
    y = (x - mean) / jnp.sqrt(var + EPS) * g[None, :, None] + b[None, :, None]
    return jnp.maximum(y, 0.0)


def decoder_reference(z, params):
    x = jnp.einsum('ni,ict->nct', z[:, :, 0], params["w1"])
    x = _ref_bn_relu(x, params["g1"], params["b1"])
    x = _ref_bn_relu(_ref_deconv_s2(x, params["w2"]), params["g2"], params["b2"])
    x = _ref_bn_relu(_ref_deconv_s2(x, params["w3"]), params["g3"], params["b3"])
    x = jnp.tanh(_ref_deconv_s2(x, params["w4"]))       # (N, 1, 80)
    return x @ params["fc_w"].T + params["fc_b"]         # (N, 1, nz*2)


# ----------------------------------- main ------------------------------------

if __name__ == "__main__":
    # Small deterministic config: opt.nz_m=16, opt.ngf=8, opt.nz=16, batch=2.
    N, NZ_M, NGF, NZ = 2, 16, 8, 16

    key = jax.random.PRNGKey(0)
    k1, k2, k3, k4, k5, k6, kz = jax.random.split(key, 7)

    params = {
        # ConvTranspose1d weights, PyTorch layout (C_in, C_out, K).
        "w1": 0.1 * jax.random.normal(k1, (NZ_M,    NGF * 4, 10), jnp.float32),
        "w2": 0.1 * jax.random.normal(k2, (NGF * 4, NGF * 2, 4), jnp.float32),
        "w3": 0.1 * jax.random.normal(k3, (NGF * 2, NGF,     4), jnp.float32),
        "w4": 0.1 * jax.random.normal(k4, (NGF,     1,       4), jnp.float32),
        # BatchNorm1d affine params (PyTorch init: weight=1, bias=0).
        "g1": jnp.ones((NGF * 4,), jnp.float32),
        "b1": jnp.zeros((NGF * 4,), jnp.float32),
        "g2": jnp.ones((NGF * 2,), jnp.float32),
        "b2": jnp.zeros((NGF * 2,), jnp.float32),
        "g3": jnp.ones((NGF,), jnp.float32),
        "b3": jnp.zeros((NGF,), jnp.float32),
        # Linear(80, nz*2) weight and bias.
        "fc_w": 0.1 * jax.random.normal(k5, (NZ * 2, 80), jnp.float32),
        "fc_b": 0.1 * jax.random.normal(k6, (NZ * 2,), jnp.float32),
    }

    prep = prepare_params(params)                       # one-time, hoisted
    z = jax.random.normal(kz, (N, NZ_M, 1), jnp.float32)

    out = jax.jit(decoder_forward)(z, prep)
    out = jax.block_until_ready(out)
    assert out.shape == (N, 1, NZ * 2), out.shape
    assert bool(jnp.all(jnp.isfinite(out)))

    # Correctness vs. a pure-JAX f32 reference (bf16 MXU operands -> loose tol).
    ref = jax.jit(decoder_reference)(z, params)
    err = float(jnp.max(jnp.abs(out - ref)))
    assert err < 8e-2, f"max abs err vs reference: {err}"

    print("KERNEL_OK")
</pallas_src>

<mosaic_0001>
module attributes {stable_mosaic.version = 11 : i64} {
  func.func @decoder_kernel(%arg0: memref<160x20xbf16, #tpu.memory_space<vmem>>, %arg1: memref<32x160xbf16, #tpu.memory_space<vmem>>, %arg2: memref<64x32xbf16, #tpu.memory_space<vmem>>, %arg3: memref<64x32xbf16, #tpu.memory_space<vmem>>, %arg4: memref<16x32xbf16, #tpu.memory_space<vmem>>, %arg5: memref<32x1xf32, #tpu.memory_space<vmem>>, %arg6: memref<32x1xf32, #tpu.memory_space<vmem>>, %arg7: memref<16x1xf32, #tpu.memory_space<vmem>>, %arg8: memref<16x1xf32, #tpu.memory_space<vmem>>, %arg9: memref<8x1xf32, #tpu.memory_space<vmem>>, %arg10: memref<8x1xf32, #tpu.memory_space<vmem>>, %arg11: memref<10x32x8xbf16, #tpu.memory_space<vmem>>, %arg12: memref<32x1xf32, #tpu.memory_space<vmem>>, %arg13: memref<32x2xf32, #tpu.memory_space<vmem>>) attributes {dimension_semantics = [], scalar_prefetch = 0 : i64, scratch_operands = 0 : i64, tpu.core_type = #tpu.core_type<tc>} {
    %c0 = arith.constant 0 : index
    %c0_0 = arith.constant 0 : index
    %0 = vector.load %arg1[%c0, %c0_0] : memref<32x160xbf16, #tpu.memory_space<vmem>>, vector<32x160xbf16>
    %c0_1 = arith.constant 0 : index
    %c0_2 = arith.constant 0 : index
    %1 = vector.load %arg0[%c0_1, %c0_2] : memref<160x20xbf16, #tpu.memory_space<vmem>>, vector<160x20xbf16>
    %cst = arith.constant dense<0.000000e+00> : vector<32x20xf32>
    %2 = tpu.matmul %0, %1, %cst {dimension_numbers = #tpu.dot_dimension_numbers<[1], [0], [0], [1], [0, 0, 1, 1], [], []>} : vector<32x160xbf16>, vector<160x20xbf16>, vector<32x20xf32> -> vector<32x20xf32>
    %cst_3 = arith.constant dense<0.000000e+00> : vector<32xf32>
    %3 = vector.multi_reduction <add>, %2, %cst_3 [1] : vector<32x20xf32> to vector<32xf32>
    %4 = vector.shape_cast %3 : vector<32xf32> to vector<32x1xf32>
    %5 = arith.mulf %2, %2 : vector<32x20xf32>
    %cst_4 = arith.constant dense<0.000000e+00> : vector<32xf32>
    %6 = vector.multi_reduction <add>, %5, %cst_4 [1] : vector<32x20xf32> to vector<32xf32>
    %7 = vector.shape_cast %6 : vector<32xf32> to vector<32x1xf32>
    %cst_5 = arith.constant 2.000000e+01 : f32
    %8 = vector.broadcast %cst_5 : f32 to vector<32x1xf32>
    %9 = arith.divf %4, %8 : vector<32x1xf32>
    %cst_6 = arith.constant 2.000000e+01 : f32
    %10 = vector.broadcast %cst_6 : f32 to vector<32x1xf32>
    %11 = arith.divf %7, %10 : vector<32x1xf32>
    %12 = arith.mulf %9, %9 : vector<32x1xf32>
    %13 = arith.subf %11, %12 : vector<32x1xf32>
    %cst_7 = arith.constant 0.000000e+00 : f32
    %14 = vector.broadcast %cst_7 : f32 to vector<32x1xf32>
    %15 = arith.maximumf %13, %14 : vector<32x1xf32>
    %c0_8 = arith.constant 0 : index
    %c0_9 = arith.constant 0 : index
    %16 = vector.load %arg5[%c0_8, %c0_9] : memref<32x1xf32, #tpu.memory_space<vmem>>, vector<32x1xf32>
    %cst_10 = arith.constant 9.99999974E-6 : f32
    %17 = vector.broadcast %cst_10 : f32 to vector<32x1xf32>
    %18 = arith.addf %15, %17 : vector<32x1xf32>
    %19 = math.rsqrt %18 : vector<32x1xf32>
    %20 = arith.mulf %16, %19 : vector<32x1xf32>
    %c0_11 = arith.constant 0 : index
    %c0_12 = arith.constant 0 : index
    %21 = vector.load %arg6[%c0_11, %c0_12] : memref<32x1xf32, #tpu.memory_space<vmem>>, vector<32x1xf32>
    %22 = arith.mulf %9, %20 : vector<32x1xf32>
    %23 = arith.subf %21, %22 : vector<32x1xf32>
    %24 = vector.broadcast %20 : vector<32x1xf32> to vector<32x20xf32>
    %25 = arith.mulf %2, %24 : vector<32x20xf32>
    %26 = vector.broadcast %23 : vector<32x1xf32> to vector<32x20xf32>
    %27 = arith.addf %25, %26 : vector<32x20xf32>
    %cst_13 = arith.constant 0.000000e+00 : f32
    %28 = vector.broadcast %cst_13 : f32 to vector<32x20xf32>
    %29 = arith.maximumf %27, %28 : vector<32x20xf32>
    %c0_14 = arith.constant 0 : index
    %c0_15 = arith.constant 0 : index
    %30 = vector.load %arg2[%c0_14, %c0_15] : memref<64x32xbf16, #tpu.memory_space<vmem>>, vector<64x32xbf16>
    %31 = arith.truncf %29 : vector<32x20xf32> to vector<32x20xbf16>
    %cst_16 = arith.constant dense<0.000000e+00> : vector<64x20xf32>
    %32 = tpu.matmul %30, %31, %cst_16 {dimension_numbers = #tpu.dot_dimension_numbers<[1], [0], [0], [1], [0, 0, 1, 1], [], []>} : vector<64x32xbf16>, vector<32x20xbf16>, vector<64x20xf32> -> vector<64x20xf32>
    %33 = vector.extract_strided_slice %32 {offsets = [48, 0], sizes = [16, 20], strides = [1, 1]} : vector<64x20xf32> to vector<16x20xf32>
    %cst_17 = arith.constant 0.000000e+00 : f32
    %34 = vector.broadcast %cst_17 : f32 to vector<16x2xf32>
    %35 = vector.extract_strided_slice %33 {offsets = [0, 0], sizes = [16, 18], strides = [1, 1]} : vector<16x20xf32> to vector<16x18xf32>
    %36 = tpu.concatenate %34, %35 in 1 : vector<16x2xf32>, vector<16x18xf32> -> vector<16x20xf32>
    %37 = vector.extract_strided_slice %32 {offsets = [0, 0], sizes = [16, 20], strides = [1, 1]} : vector<64x20xf32> to vector<16x20xf32>
    %38 = vector.extract_strided_slice %37 {offsets = [0, 2], sizes = [16, 18], strides = [1, 1]} : vector<16x20xf32> to vector<16x18xf32>
    %cst_18 = arith.constant 0.000000e+00 : f32
    %39 = vector.broadcast %cst_18 : f32 to vector<16x2xf32>
    %40 = tpu.concatenate %38, %39 in 1 : vector<16x18xf32>, vector<16x2xf32> -> vector<16x20xf32>
    %41 = vector.extract_strided_slice %32 {offsets = [16, 0], sizes = [16, 20], strides = [1, 1]} : vector<64x20xf32> to vector<16x20xf32>
    %42 = arith.addf %41, %36 : vector<16x20xf32>
    %43 = vector.extract_strided_slice %32 {offsets = [32, 0], sizes = [16, 20], strides = [1, 1]} : vector<64x20xf32> to vector<16x20xf32>
    %44 = arith.addf %43, %40 : vector<16x20xf32>
    %45 = tpu.concatenate %42, %44 in 0 : vector<16x20xf32>, vector<16x20xf32> -> vector<32x20xf32>
    %cst_19 = arith.constant dense<0.000000e+00> : vector<32xf32>
    %46 = vector.multi_reduction <add>, %45, %cst_19 [1] : vector<32x20xf32> to vector<32xf32>
    %47 = vector.shape_cast %46 : vector<32xf32> to vector<32x1xf32>
    %48 = arith.mulf %45, %45 : vector<32x20xf32>
    %cst_20 = arith.constant dense<0.000000e+00> : vector<32xf32>
    %49 = vector.multi_reduction <add>, %48, %cst_20 [1] : vector<32x20xf32> to vector<32xf32>
    %50 = vector.shape_cast %49 : vector<32xf32> to vector<32x1xf32>
    %51 = vector.extract_strided_slice %47 {offsets = [0, 0], sizes = [16, 1], strides = [1, 1]} : vector<32x1xf32> to vector<16x1xf32>
    %52 = vector.extract_strided_slice %50 {offsets = [0, 0], sizes = [16, 1], strides = [1, 1]} : vector<32x1xf32> to vector<16x1xf32>
    %53 = vector.extract_strided_slice %47 {offsets = [16, 0], sizes = [16, 1], strides = [1, 1]} : vector<32x1xf32> to vector<16x1xf32>
    %54 = arith.addf %51, %53 : vector<16x1xf32>
    %55 = vector.extract_strided_slice %50 {offsets = [16, 0], sizes = [16, 1], strides = [1, 1]} : vector<32x1xf32> to vector<16x1xf32>
    %56 = arith.addf %52, %55 : vector<16x1xf32>
    %cst_21 = arith.constant 4.000000e+01 : f32
    %57 = vector.broadcast %cst_21 : f32 to vector<16x1xf32>
    %58 = arith.divf %54, %57 : vector<16x1xf32>
    %cst_22 = arith.constant 4.000000e+01 : f32
    %59 = vector.broadcast %cst_22 : f32 to vector<16x1xf32>
    %60 = arith.divf %56, %59 : vector<16x1xf32>
    %61 = arith.mulf %58, %58 : vector<16x1xf32>
    %62 = arith.subf %60, %61 : vector<16x1xf32>
    %cst_23 = arith.constant 0.000000e+00 : f32
    %63 = vector.broadcast %cst_23 : f32 to vector<16x1xf32>
    %64 = arith.maximumf %62, %63 : vector<16x1xf32>
    %c0_24 = arith.constant 0 : index
    %c0_25 = arith.constant 0 : index
    %65 = vector.load %arg7[%c0_24, %c0_25] : memref<16x1xf32, #tpu.memory_space<vmem>>, vector<16x1xf32>
    %cst_26 = arith.constant 9.99999974E-6 : f32
    %66 = vector.broadcast %cst_26 : f32 to vector<16x1xf32>
    %67 = arith.addf %64, %66 : vector<16x1xf32>
    %68 = math.rsqrt %67 : vector<16x1xf32>
    %69 = arith.mulf %65, %68 : vector<16x1xf32>
    %c0_27 = arith.constant 0 : index
    %c0_28 = arith.constant 0 : index
    %70 = vector.load %arg8[%c0_27, %c0_28] : memref<16x1xf32, #tpu.memory_space<vmem>>, vector<16x1xf32>
    %71 = arith.mulf %58, %69 : vector<16x1xf32>
    %72 = arith.subf %70, %71 : vector<16x1xf32>
    %73 = tpu.concatenate %69, %69 in 0 : vector<16x1xf32>, vector<16x1xf32> -> vector<32x1xf32>
    %74 = tpu.concatenate %72, %72 in 0 : vector<16x1xf32>, vector<16x1xf32> -> vector<32x1xf32>
    %75 = vector.broadcast %73 : vector<32x1xf32> to vector<32x20xf32>
    %76 = arith.mulf %45, %75 : vector<32x20xf32>
    %77 = vector.broadcast %74 : vector<32x1xf32> to vector<32x20xf32>
    %78 = arith.addf %76, %77 : vector<32x20xf32>
    %cst_29 = arith.constant 0.000000e+00 : f32
    %79 = vector.broadcast %cst_29 : f32 to vector<32x20xf32>
    %80 = arith.maximumf %78, %79 : vector<32x20xf32>
    %c0_30 = arith.constant 0 : index
    %c0_31 = arith.constant 0 : index
    %81 = vector.load %arg3[%c0_30, %c0_31] : memref<64x32xbf16, #tpu.memory_space<vmem>>, vector<64x32xbf16>
    %82 = arith.truncf %80 : vector<32x20xf32> to vector<32x20xbf16>
    %cst_32 = arith.constant dense<0.000000e+00> : vector<64x20xf32>
    %83 = tpu.matmul %81, %82, %cst_32 {dimension_numbers = #tpu.dot_dimension_numbers<[1], [0], [0], [1], [0, 0, 1, 1], [], []>} : vector<64x32xbf16>, vector<32x20xbf16>, vector<64x20xf32> -> vector<64x20xf32>
    %84 = vector.extract_strided_slice %83 {offsets = [56, 0], sizes = [8, 20], strides = [1, 1]} : vector<64x20xf32> to vector<8x20xf32>
    %cst_33 = arith.constant 0.000000e+00 : f32
    %85 = vector.broadcast %cst_33 : f32 to vector<8x2xf32>
    %86 = vector.extract_strided_slice %84 {offsets = [0, 0], sizes = [8, 18], strides = [1, 1]} : vector<8x20xf32> to vector<8x18xf32>
    %87 = tpu.concatenate %85, %86 in 1 : vector<8x2xf32>, vector<8x18xf32> -> vector<8x20xf32>
    %88 = vector.extract_strided_slice %83 {offsets = [32, 0], sizes = [8, 20], strides = [1, 1]} : vector<64x20xf32> to vector<8x20xf32>
    %89 = vector.extract_strided_slice %83 {offsets = [8, 0], sizes = [8, 20], strides = [1, 1]} : vector<64x20xf32> to vector<8x20xf32>
    %90 = arith.addf %89, %87 : vector<8x20xf32>
    %91 = vector.extract_strided_slice %83 {offsets = [16, 0], sizes = [8, 20], strides = [1, 1]} : vector<64x20xf32> to vector<8x20xf32>
    %92 = arith.addf %91, %88 : vector<8x20xf32>
    %93 = vector.extract_strided_slice %83 {offsets = [24, 0], sizes = [8, 20], strides = [1, 1]} : vector<64x20xf32> to vector<8x20xf32>
    %94 = vector.extract_strided_slice %83 {offsets = [0, 0], sizes = [8, 20], strides = [1, 1]} : vector<64x20xf32> to vector<8x20xf32>
    %95 = vector.extract_strided_slice %94 {offsets = [0, 2], sizes = [8, 18], strides = [1, 1]} : vector<8x20xf32> to vector<8x18xf32>
    %cst_34 = arith.constant 0.000000e+00 : f32
    %96 = vector.broadcast %cst_34 : f32 to vector<8x2xf32>
    %97 = tpu.concatenate %95, %96 in 1 : vector<8x18xf32>, vector<8x2xf32> -> vector<8x20xf32>
    %98 = vector.extract_strided_slice %83 {offsets = [40, 0], sizes = [8, 20], strides = [1, 1]} : vector<64x20xf32> to vector<8x20xf32>
    %99 = arith.addf %98, %93 : vector<8x20xf32>
    %100 = vector.extract_strided_slice %83 {offsets = [48, 0], sizes = [8, 20], strides = [1, 1]} : vector<64x20xf32> to vector<8x20xf32>
    %101 = arith.addf %100, %97 : vector<8x20xf32>
    %102 = tpu.concatenate %90, %92, %99, %101 in 0 : vector<8x20xf32>, vector<8x20xf32>, vector<8x20xf32>, vector<8x20xf32> -> vector<32x20xf32>
    %cst_35 = arith.constant dense<0.000000e+00> : vector<32xf32>
    %103 = vector.multi_reduction <add>, %102, %cst_35 [1] : vector<32x20xf32> to vector<32xf32>
    %104 = vector.shape_cast %103 : vector<32xf32> to vector<32x1xf32>
    %105 = arith.mulf %102, %102 : vector<32x20xf32>
    %cst_36 = arith.constant dense<0.000000e+00> : vector<32xf32>
    %106 = vector.multi_reduction <add>, %105, %cst_36 [1] : vector<32x20xf32> to vector<32xf32>
    %107 = vector.shape_cast %106 : vector<32xf32> to vector<32x1xf32>
    %108 = vector.extract_strided_slice %104 {offsets = [0, 0], sizes = [8, 1], strides = [1, 1]} : vector<32x1xf32> to vector<8x1xf32>
    %109 = vector.extract_strided_slice %107 {offsets = [0, 0], sizes = [8, 1], strides = [1, 1]} : vector<32x1xf32> to vector<8x1xf32>
    %110 = vector.extract_strided_slice %104 {offsets = [8, 0], sizes = [8, 1], strides = [1, 1]} : vector<32x1xf32> to vector<8x1xf32>
    %111 = arith.addf %108, %110 : vector<8x1xf32>
    %112 = vector.extract_strided_slice %107 {offsets = [8, 0], sizes = [8, 1], strides = [1, 1]} : vector<32x1xf32> to vector<8x1xf32>
    %113 = arith.addf %109, %112 : vector<8x1xf32>
    %114 = vector.extract_strided_slice %104 {offsets = [16, 0], sizes = [8, 1], strides = [1, 1]} : vector<32x1xf32> to vector<8x1xf32>
    %115 = arith.addf %111, %114 : vector<8x1xf32>
    %116 = vector.extract_strided_slice %107 {offsets = [16, 0], sizes = [8, 1], strides = [1, 1]} : vector<32x1xf32> to vector<8x1xf32>
    %117 = arith.addf %113, %116 : vector<8x1xf32>
    %118 = vector.extract_strided_slice %104 {offsets = [24, 0], sizes = [8, 1], strides = [1, 1]} : vector<32x1xf32> to vector<8x1xf32>
    %119 = arith.addf %115, %118 : vector<8x1xf32>
    %120 = vector.extract_strided_slice %107 {offsets = [24, 0], sizes = [8, 1], strides = [1, 1]} : vector<32x1xf32> to vector<8x1xf32>
    %121 = arith.addf %117, %120 : vector<8x1xf32>
    %cst_37 = arith.constant 8.000000e+01 : f32
    %122 = vector.broadcast %cst_37 : f32 to vector<8x1xf32>
    %123 = arith.divf %119, %122 : vector<8x1xf32>
    %cst_38 = arith.constant 8.000000e+01 : f32
    %124 = vector.broadcast %cst_38 : f32 to vector<8x1xf32>
    %125 = arith.divf %121, %124 : vector<8x1xf32>
    %126 = arith.mulf %123, %123 : vector<8x1xf32>
    %127 = arith.subf %125, %126 : vector<8x1xf32>
    %cst_39 = arith.constant 0.000000e+00 : f32
    %128 = vector.broadcast %cst_39 : f32 to vector<8x1xf32>
    %129 = arith.maximumf %127, %128 : vector<8x1xf32>
    %c0_40 = arith.constant 0 : index
    %c0_41 = arith.constant 0 : index
    %130 = vector.load %arg9[%c0_40, %c0_41] : memref<8x1xf32, #tpu.memory_space<vmem>>, vector<8x1xf32>
    %cst_42 = arith.constant 9.99999974E-6 : f32
    %131 = vector.broadcast %cst_42 : f32 to vector<8x1xf32>
    %132 = arith.addf %129, %131 : vector<8x1xf32>
    %133 = math.rsqrt %132 : vector<8x1xf32>
    %134 = arith.mulf %130, %133 : vector<8x1xf32>
    %c0_43 = arith.constant 0 : index
    %c0_44 = arith.constant 0 : index
    %135 = vector.load %arg10[%c0_43, %c0_44] : memref<8x1xf32, #tpu.memory_space<vmem>>, vector<8x1xf32>
    %136 = arith.mulf %123, %134 : vector<8x1xf32>
    %137 = arith.subf %135, %136 : vector<8x1xf32>
    %138 = tpu.concatenate %134, %134, %134, %134 in 0 : vector<8x1xf32>, vector<8x1xf32>, vector<8x1xf32>, vector<8x1xf32> -> vector<32x1xf32>
    %139 = tpu.concatenate %137, %137, %137, %137 in 0 : vector<8x1xf32>, vector<8x1xf32>, vector<8x1xf32>, vector<8x1xf32> -> vector<32x1xf32>
    %140 = vector.broadcast %138 : vector<32x1xf32> to vector<32x20xf32>
    %141 = arith.mulf %102, %140 : vector<32x20xf32>
    %142 = vector.broadcast %139 : vector<32x1xf32> to vector<32x20xf32>
    %143 = arith.addf %141, %142 : vector<32x20xf32>
    %cst_45 = arith.constant 0.000000e+00 : f32
    %144 = vector.broadcast %cst_45 : f32 to vector<32x20xf32>
    %145 = arith.maximumf %143, %144 : vector<32x20xf32>
    %c0_46 = arith.constant 0 : index
    %c0_47 = arith.constant 0 : index
    %146 = vector.load %arg4[%c0_46, %c0_47] : memref<16x32xbf16, #tpu.memory_space<vmem>>, vector<16x32xbf16>
    %147 = arith.truncf %145 : vector<32x20xf32> to vector<32x20xbf16>
    %cst_48 = arith.constant dense<0.000000e+00> : vector<16x20xf32>
    %148 = tpu.matmul %146, %147, %cst_48 {dimension_numbers = #tpu.dot_dimension_numbers<[1], [0], [0], [1], [0, 0, 1, 1], [], []>} : vector<16x32xbf16>, vector<32x20xbf16>, vector<16x20xf32> -> vector<16x20xf32>
    %149 = vector.extract_strided_slice %148 {offsets = [15, 0], sizes = [1, 20], strides = [1, 1]} : vector<16x20xf32> to vector<1x20xf32>
    %cst_49 = arith.constant 0.000000e+00 : f32
    %150 = vector.broadcast %cst_49 : f32 to vector<1x2xf32>
    %151 = vector.extract_strided_slice %149 {offsets = [0, 0], sizes = [1, 18], strides = [1, 1]} : vector<1x20xf32> to vector<1x18xf32>
    %152 = tpu.concatenate %150, %151 in 1 : vector<1x2xf32>, vector<1x18xf32> -> vector<1x20xf32>
    %153 = vector.extract_strided_slice %148 {offsets = [4, 0], sizes = [1, 20], strides = [1, 1]} : vector<16x20xf32> to vector<1x20xf32>
    %154 = vector.extract_strided_slice %148 {offsets = [1, 0], sizes = [1, 20], strides = [1, 1]} : vector<16x20xf32> to vector<1x20xf32>
    %155 = arith.addf %154, %152 : vector<1x20xf32>
    %156 = vector.extract_strided_slice %148 {offsets = [2, 0], sizes = [1, 20], strides = [1, 1]} : vector<16x20xf32> to vector<1x20xf32>
    %157 = arith.addf %156, %153 : vector<1x20xf32>
    %158 = vector.extract_strided_slice %148 {offsets = [3, 0], sizes = [1, 20], strides = [1, 1]} : vector<16x20xf32> to vector<1x20xf32>
    %159 = vector.extract_strided_slice %148 {offsets = [8, 0], sizes = [1, 20], strides = [1, 1]} : vector<16x20xf32> to vector<1x20xf32>
    %160 = vector.extract_strided_slice %148 {offsets = [5, 0], sizes = [1, 20], strides = [1, 1]} : vector<16x20xf32> to vector<1x20xf32>
    %161 = arith.addf %160, %158 : vector<1x20xf32>
    %162 = vector.extract_strided_slice %148 {offsets = [6, 0], sizes = [1, 20], strides = [1, 1]} : vector<16x20xf32> to vector<1x20xf32>
    %163 = arith.addf %162, %159 : vector<1x20xf32>
    %164 = vector.extract_strided_slice %148 {offsets = [7, 0], sizes = [1, 20], strides = [1, 1]} : vector<16x20xf32> to vector<1x20xf32>
    %165 = vector.extract_strided_slice %148 {offsets = [12, 0], sizes = [1, 20], strides = [1, 1]} : vector<16x20xf32> to vector<1x20xf32>
    %166 = vector.extract_strided_slice %148 {offsets = [9, 0], sizes = [1, 20], strides = [1, 1]} : vector<16x20xf32> to vector<1x20xf32>
    %167 = arith.addf %166, %164 : vector<1x20xf32>
    %168 = vector.extract_strided_slice %148 {offsets = [10, 0], sizes = [1, 20], strides = [1, 1]} : vector<16x20xf32> to vector<1x20xf32>
    %169 = arith.addf %168, %165 : vector<1x20xf32>
    %170 = vector.extract_strided_slice %148 {offsets = [11, 0], sizes = [1, 20], strides = [1, 1]} : vector<16x20xf32> to vector<1x20xf32>
    %171 = vector.extract_strided_slice %148 {offsets = [0, 0], sizes = [1, 20], strides = [1, 1]} : vector<16x20xf32> to vector<1x20xf32>
    %172 = vector.extract_strided_slice %171 {offsets = [0, 2], sizes = [1, 18], strides = [1, 1]} : vector<1x20xf32> to vector<1x18xf32>
    %cst_50 = arith.constant 0.000000e+00 : f32
    %173 = vector.broadcast %cst_50 : f32 to vector<1x2xf32>
    %174 = tpu.concatenate %172, %173 in 1 : vector<1x18xf32>, vector<1x2xf32> -> vector<1x20xf32>
    %175 = vector.extract_strided_slice %148 {offsets = [13, 0], sizes = [1, 20], strides = [1, 1]} : vector<16x20xf32> to vector<1x20xf32>
    %176 = arith.addf %175, %170 : vector<1x20xf32>
    %177 = vector.extract_strided_slice %148 {offsets = [14, 0], sizes = [1, 20], strides = [1, 1]} : vector<16x20xf32> to vector<1x20xf32>
    %178 = arith.addf %177, %174 : vector<1x20xf32>
    %179 = tpu.concatenate %155, %157, %161, %163, %167, %169, %176, %178 in 0 : vector<1x20xf32>, vector<1x20xf32>, vector<1x20xf32>, vector<1x20xf32>, vector<1x20xf32>, vector<1x20xf32>, vector<1x20xf32>, vector<1x20xf32> -> vector<8x20xf32>
    %180 = math.tanh %179 : vector<8x20xf32>
    %181 = arith.truncf %180 : vector<8x20xf32> to vector<8x20xbf16>
    %cst_51 = arith.constant 0.000000e+00 : f32
    %182 = vector.broadcast %cst_51 : f32 to vector<32x2xf32>
    %c0_52 = arith.constant 0 : index
    %c0_53 = arith.constant 0 : index
    %c0_54 = arith.constant 0 : index
    %183 = vector.load %arg11[%c0_52, %c0_53, %c0_54] : memref<10x32x8xbf16, #tpu.memory_space<vmem>>, vector<1x32x8xbf16>
    %184 = vector.shape_cast %183 : vector<1x32x8xbf16> to vector<32x8xbf16>
    %185 = vector.extract_strided_slice %181 {offsets = [0, 0], sizes = [8, 2], strides = [1, 1]} : vector<8x20xbf16> to vector<8x2xbf16>
    %cst_55 = arith.constant dense<0.000000e+00> : vector<32x2xf32>
    %186 = tpu.matmul %184, %185, %cst_55 {dimension_numbers = #tpu.dot_dimension_numbers<[1], [0], [0], [1], [0, 0, 1, 1], [], []>} : vector<32x8xbf16>, vector<8x2xbf16>, vector<32x2xf32> -> vector<32x2xf32>
    %187 = arith.addf %182, %186 : vector<32x2xf32>
    %c1 = arith.constant 1 : index
    %c0_56 = arith.constant 0 : index
    %c0_57 = arith.constant 0 : index
    %188 = vector.load %arg11[%c1, %c0_56, %c0_57] : memref<10x32x8xbf16, #tpu.memory_space<vmem>>, vector<1x32x8xbf16>
    %189 = vector.shape_cast %188 : vector<1x32x8xbf16> to vector<32x8xbf16>
    %190 = vector.extract_strided_slice %181 {offsets = [0, 2], sizes = [8, 2], strides = [1, 1]} : vector<8x20xbf16> to vector<8x2xbf16>
    %cst_58 = arith.constant dense<0.000000e+00> : vector<32x2xf32>
    %191 = tpu.matmul %189, %190, %cst_58 {dimension_numbers = #tpu.dot_dimension_numbers<[1], [0], [0], [1], [0, 0, 1, 1], [], []>} : vector<32x8xbf16>, vector<8x2xbf16>, vector<32x2xf32> -> vector<32x2xf32>
    %192 = arith.addf %187, %191 : vector<32x2xf32>
    %c2 = arith.constant 2 : index
    %c0_59 = arith.constant 0 : index
    %c0_60 = arith.constant 0 : index
    %193 = vector.load %arg11[%c2, %c0_59, %c0_60] : memref<10x32x8xbf16, #tpu.memory_space<vmem>>, vector<1x32x8xbf16>
    %194 = vector.shape_cast %193 : vector<1x32x8xbf16> to vector<32x8xbf16>
    %195 = vector.extract_strided_slice %181 {offsets = [0, 4], sizes = [8, 2], strides = [1, 1]} : vector<8x20xbf16> to vector<8x2xbf16>
    %cst_61 = arith.constant dense<0.000000e+00> : vector<32x2xf32>
    %196 = tpu.matmul %194, %195, %cst_61 {dimension_numbers = #tpu.dot_dimension_numbers<[1], [0], [0], [1], [0, 0, 1, 1], [], []>} : vector<32x8xbf16>, vector<8x2xbf16>, vector<32x2xf32> -> vector<32x2xf32>
    %197 = arith.addf %192, %196 : vector<32x2xf32>
    %c3 = arith.constant 3 : index
    %c0_62 = arith.constant 0 : index
    %c0_63 = arith.constant 0 : index
    %198 = vector.load %arg11[%c3, %c0_62, %c0_63] : memref<10x32x8xbf16, #tpu.memory_space<vmem>>, vector<1x32x8xbf16>
    %199 = vector.shape_cast %198 : vector<1x32x8xbf16> to vector<32x8xbf16>
    %200 = vector.extract_strided_slice %181 {offsets = [0, 6], sizes = [8, 2], strides = [1, 1]} : vector<8x20xbf16> to vector<8x2xbf16>
    %cst_64 = arith.constant dense<0.000000e+00> : vector<32x2xf32>
    %201 = tpu.matmul %199, %200, %cst_64 {dimension_numbers = #tpu.dot_dimension_numbers<[1], [0], [0], [1], [0, 0, 1, 1], [], []>} : vector<32x8xbf16>, vector<8x2xbf16>, vector<32x2xf32> -> vector<32x2xf32>
    %202 = arith.addf %197, %201 : vector<32x2xf32>
    %c4 = arith.constant 4 : index
    %c0_65 = arith.constant 0 : index
    %c0_66 = arith.constant 0 : index
    %203 = vector.load %arg11[%c4, %c0_65, %c0_66] : memref<10x32x8xbf16, #tpu.memory_space<vmem>>, vector<1x32x8xbf16>
    %204 = vector.shape_cast %203 : vector<1x32x8xbf16> to vector<32x8xbf16>
    %205 = vector.extract_strided_slice %181 {offsets = [0, 8], sizes = [8, 2], strides = [1, 1]} : vector<8x20xbf16> to vector<8x2xbf16>
    %cst_67 = arith.constant dense<0.000000e+00> : vector<32x2xf32>
    %206 = tpu.matmul %204, %205, %cst_67 {dimension_numbers = #tpu.dot_dimension_numbers<[1], [0], [0], [1], [0, 0, 1, 1], [], []>} : vector<32x8xbf16>, vector<8x2xbf16>, vector<32x2xf32> -> vector<32x2xf32>
    %207 = arith.addf %202, %206 : vector<32x2xf32>
    %c5 = arith.constant 5 : index
    %c0_68 = arith.constant 0 : index
    %c0_69 = arith.constant 0 : index
    %208 = vector.load %arg11[%c5, %c0_68, %c0_69] : memref<10x32x8xbf16, #tpu.memory_space<vmem>>, vector<1x32x8xbf16>
    %209 = vector.shape_cast %208 : vector<1x32x8xbf16> to vector<32x8xbf16>
    %210 = vector.extract_strided_slice %181 {offsets = [0, 10], sizes = [8, 2], strides = [1, 1]} : vector<8x20xbf16> to vector<8x2xbf16>
    %cst_70 = arith.constant dense<0.000000e+00> : vector<32x2xf32>
    %211 = tpu.matmul %209, %210, %cst_70 {dimension_numbers = #tpu.dot_dimension_numbers<[1], [0], [0], [1], [0, 0, 1, 1], [], []>} : vector<32x8xbf16>, vector<8x2xbf16>, vector<32x2xf32> -> vector<32x2xf32>
    %212 = arith.addf %207, %211 : vector<32x2xf32>
    %c6 = arith.constant 6 : index
    %c0_71 = arith.constant 0 : index
    %c0_72 = arith.constant 0 : index
    %213 = vector.load %arg11[%c6, %c0_71, %c0_72] : memref<10x32x8xbf16, #tpu.memory_space<vmem>>, vector<1x32x8xbf16>
    %214 = vector.shape_cast %213 : vector<1x32x8xbf16> to vector<32x8xbf16>
    %215 = vector.extract_strided_slice %181 {offsets = [0, 12], sizes = [8, 2], strides = [1, 1]} : vector<8x20xbf16> to vector<8x2xbf16>
    %cst_73 = arith.constant dense<0.000000e+00> : vector<32x2xf32>
    %216 = tpu.matmul %214, %215, %cst_73 {dimension_numbers = #tpu.dot_dimension_numbers<[1], [0], [0], [1], [0, 0, 1, 1], [], []>} : vector<32x8xbf16>, vector<8x2xbf16>, vector<32x2xf32> -> vector<32x2xf32>
    %217 = arith.addf %212, %216 : vector<32x2xf32>
    %c7 = arith.constant 7 : index
    %c0_74 = arith.constant 0 : index
    %c0_75 = arith.constant 0 : index
    %218 = vector.load %arg11[%c7, %c0_74, %c0_75] : memref<10x32x8xbf16, #tpu.memory_space<vmem>>, vector<1x32x8xbf16>
    %219 = vector.shape_cast %218 : vector<1x32x8xbf16> to vector<32x8xbf16>
    %220 = vector.extract_strided_slice %181 {offsets = [0, 14], sizes = [8, 2], strides = [1, 1]} : vector<8x20xbf16> to vector<8x2xbf16>
    %cst_76 = arith.constant dense<0.000000e+00> : vector<32x2xf32>
    %221 = tpu.matmul %219, %220, %cst_76 {dimension_numbers = #tpu.dot_dimension_numbers<[1], [0], [0], [1], [0, 0, 1, 1], [], []>} : vector<32x8xbf16>, vector<8x2xbf16>, vector<32x2xf32> -> vector<32x2xf32>
    %222 = arith.addf %217, %221 : vector<32x2xf32>
    %c8 = arith.constant 8 : index
    %c0_77 = arith.constant 0 : index
    %c0_78 = arith.constant 0 : index
    %223 = vector.load %arg11[%c8, %c0_77, %c0_78] : memref<10x32x8xbf16, #tpu.memory_space<vmem>>, vector<1x32x8xbf16>
    %224 = vector.shape_cast %223 : vector<1x32x8xbf16> to vector<32x8xbf16>
    %225 = vector.extract_strided_slice %181 {offsets = [0, 16], sizes = [8, 2], strides = [1, 1]} : vector<8x20xbf16> to vector<8x2xbf16>
    %cst_79 = arith.constant dense<0.000000e+00> : vector<32x2xf32>
    %226 = tpu.matmul %224, %225, %cst_79 {dimension_numbers = #tpu.dot_dimension_numbers<[1], [0], [0], [1], [0, 0, 1, 1], [], []>} : vector<32x8xbf16>, vector<8x2xbf16>, vector<32x2xf32> -> vector<32x2xf32>
    %227 = arith.addf %222, %226 : vector<32x2xf32>
    %c9 = arith.constant 9 : index
    %c0_80 = arith.constant 0 : index
    %c0_81 = arith.constant 0 : index
    %228 = vector.load %arg11[%c9, %c0_80, %c0_81] : memref<10x32x8xbf16, #tpu.memory_space<vmem>>, vector<1x32x8xbf16>
    %229 = vector.shape_cast %228 : vector<1x32x8xbf16> to vector<32x8xbf16>
    %230 = vector.extract_strided_slice %181 {offsets = [0, 18], sizes = [8, 2], strides = [1, 1]} : vector<8x20xbf16> to vector<8x2xbf16>
    %cst_82 = arith.constant dense<0.000000e+00> : vector<32x2xf32>
    %231 = tpu.matmul %229, %230, %cst_82 {dimension_numbers = #tpu.dot_dimension_numbers<[1], [0], [0], [1], [0, 0, 1, 1], [], []>} : vector<32x8xbf16>, vector<8x2xbf16>, vector<32x2xf32> -> vector<32x2xf32>
    %232 = arith.addf %227, %231 : vector<32x2xf32>
    %c0_83 = arith.constant 0 : index
    %c0_84 = arith.constant 0 : index
    %233 = vector.load %arg12[%c0_83, %c0_84] : memref<32x1xf32, #tpu.memory_space<vmem>>, vector<32x1xf32>
    %234 = vector.broadcast %233 : vector<32x1xf32> to vector<32x2xf32>
    %235 = arith.addf %232, %234 : vector<32x2xf32>
    %c0_85 = arith.constant 0 : index
    %c0_86 = arith.constant 0 : index
    %236 = vector.load %arg13[%c0_85, %c0_86] : memref<32x2xf32, #tpu.memory_space<vmem>>, vector<32x2xf32>
    tpu.vector_store %arg13[%c0_85, %c0_86], %235 {strides = array<i32>} : memref<32x2xf32, #tpu.memory_space<vmem>>, vector<32x2xf32>,
    return
  }
}

</mosaic_0001>

<llo_original>
// kernel: tile.8
$region0: #{tile.8}
  #allocation0 [shape = 's32[1]{0}', space=sflag, size = 0x4, scoped, tag = 'scoped memory for tile.8']
  %s0 = inlined_call_operand.vmem [shape: f32[16,2], index: 0, kind: input, shape index: {}]
  %s1 = inlined_call_operand.vmem [shape: bf16[10,16,10,2], index: 1, kind: output, shape index: {}]
  // Predicated region
  $region2: #{tile.8} parent=0 // pred_check
    _
  $region3: #{tile.8} parent=0 // pred_check_branch
    %3 = sbr.rel (0) target = $region5
  $region4: #{tile.8} parent=0 // pred_region
    _
  $region5: #{tile.8} parent=0 // pred_fallthru
    _
  %v4 = vld [vmem:[%s0] ss:$0 sm:$0xff]
  %v5 = vpack.c.bf16 0.0, %v4
  %6 = vst [vmem:[%s1] sm:$0xf] %v5
  %s7 = scalar_lea.vmem %s1, 16
  %v8 = vpack.c.bf16 0.0, %v4
  %9 = vst [vmem:[%s7] sm:$0xf] %v8
  %s10 = scalar_lea.vmem %s1, 32
  %v11 = vpack.c.bf16 0.0, %v4
  %12 = vst [vmem:[%s10] sm:$0xf] %v11
  %s13 = scalar_lea.vmem %s1, 48
  %v14 = vpack.c.bf16 0.0, %v4
  %15 = vst [vmem:[%s13] sm:$0xf] %v14
  %s16 = scalar_lea.vmem %s1, 64
  %v17 = vpack.c.bf16 0.0, %v4
  %18 = vst [vmem:[%s16] sm:$0xf] %v17
  %s19 = scalar_lea.vmem %s1, 80
  %v20 = vpack.c.bf16 0.0, %v4
  %21 = vst [vmem:[%s19] sm:$0xf] %v20
  %s22 = scalar_lea.vmem %s1, 96
  %v23 = vpack.c.bf16 0.0, %v4
  %24 = vst [vmem:[%s22] sm:$0xf] %v23
  %s25 = scalar_lea.vmem %s1, 112
  %v26 = vpack.c.bf16 0.0, %v4
  %27 = vst [vmem:[%s25] sm:$0xf] %v26
  %s28 = scalar_lea.vmem %s1, 128
  %v29 = vpack.c.bf16 0.0, %v4
  %30 = vst [vmem:[%s28] sm:$0xf] %v29
  %s31 = scalar_lea.vmem %s1, 144
  %v32 = vpack.c.bf16 0.0, %v4
  %33 = vst [vmem:[%s31] sm:$0xf] %v32
  %s34 = scalar_lea.vmem %s0, 1
  %v35 = vld [vmem:[%s34] ss:$0 sm:$0xff]
  %s36 = scalar_lea.vmem %s1, 8
  %v37 = vpack.c.bf16 0.0, %v35
  %38 = vst [vmem:[%s36] sm:$0xf] %v37
  %s39 = scalar_lea.vmem %s1, 24
  %v40 = vpack.c.bf16 0.0, %v35
  %41 = vst [vmem:[%s39] sm:$0xf] %v40
  %s42 = scalar_lea.vmem %s1, 40
  %v43 = vpack.c.bf16 0.0, %v35
  %44 = vst [vmem:[%s42] sm:$0xf] %v43
  %s45 = scalar_lea.vmem %s1, 56
  %v46 = vpack.c.bf16 0.0, %v35
  %47 = vst [vmem:[%s45] sm:$0xf] %v46
  %s48 = scalar_lea.vmem %s1, 72
  %v49 = vpack.c.bf16 0.0, %v35
  %50 = vst [vmem:[%s48] sm:$0xf] %v49
  %s51 = scalar_lea.vmem %s1, 88
  %v52 = vpack.c.bf16 0.0, %v35
  %53 = vst [vmem:[%s51] sm:$0xf] %v52
  %s54 = scalar_lea.vmem %s1, 104
  %v55 = vpack.c.bf16 0.0, %v35
  %56 = vst [vmem:[%s54] sm:$0xf] %v55
  %s57 = scalar_lea.vmem %s1, 120
  %v58 = vpack.c.bf16 0.0, %v35
  %59 = vst [vmem:[%s57] sm:$0xf] %v58
  %s60 = scalar_lea.vmem %s1, 136
  %v61 = vpack.c.bf16 0.0, %v35
  %62 = vst [vmem:[%s60] sm:$0xf] %v61
  %s63 = scalar_lea.vmem %s1, 152
  %v64 = vpack.c.bf16 0.0, %v35
  %65 = vst [vmem:[%s63] sm:$0xf] %v64
  %s66 = scalar_lea.vmem %s1, 4
  %v67 = vpack.c.bf16 0.0, %v4
  %68 = vst [vmem:[%s66] sm:$0xf] %v67
  %s69 = scalar_lea.vmem %s1, 20
  %v70 = vpack.c.bf16 0.0, %v4
  %71 = vst [vmem:[%s69] sm:$0xf] %v70
  %s72 = scalar_lea.vmem %s1, 36
  %v73 = vpack.c.bf16 0.0, %v4
  %74 = vst [vmem:[%s72] sm:$0xf] %v73
  %s75 = scalar_lea.vmem %s1, 52
  %v76 = vpack.c.bf16 0.0, %v4
  %77 = vst [vmem:[%s75] sm:$0xf] %v76
  %s78 = scalar_lea.vmem %s1, 68
  %v79 = vpack.c.bf16 0.0, %v4
  %80 = vst [vmem:[%s78] sm:$0xf] %v79
  %s81 = scalar_lea.vmem %s1, 84
  %v82 = vpack.c.bf16 0.0, %v4
  %83 = vst [vmem:[%s81] sm:$0xf] %v82
  %s84 = scalar_lea.vmem %s1, 100
  %v85 = vpack.c.bf16 0.0, %v4
  %86 = vst [vmem:[%s84] sm:$0xf] %v85
  %s87 = scalar_lea.vmem %s1, 116
  %v88 = vpack.c.bf16 0.0, %v4
  %89 = vst [vmem:[%s87] sm:$0xf] %v88
  %s90 = scalar_lea.vmem %s1, 132
  %v91 = vpack.c.bf16 0.0, %v4
  %92 = vst [vmem:[%s90] sm:$0xf] %v91
  %s93 = scalar_lea.vmem %s1, 148
  %v94 = vpack.c.bf16 0.0, %v4
  %95 = vst [vmem:[%s93] sm:$0xf] %v94
  %s96 = scalar_lea.vmem %s1, 12
  %v97 = vpack.c.bf16 0.0, %v35
  %98 = vst [vmem:[%s96] sm:$0xf] %v97
  %s99 = scalar_lea.vmem %s1, 28
  %v100 = vpack.c.bf16 0.0, %v35
  %101 = vst [vmem:[%s99] sm:$0xf] %v100
  %s102 = scalar_lea.vmem %s1, 44
  %v103 = vpack.c.bf16 0.0, %v35
  %104 = vst [vmem:[%s102] sm:$0xf] %v103
  %s105 = scalar_lea.vmem %s1, 60
  %v106 = vpack.c.bf16 0.0, %v35
  %107 = vst [vmem:[%s105] sm:$0xf] %v106
  %s108 = scalar_lea.vmem %s1, 76
  %v109 = vpack.c.bf16 0.0, %v35
  %110 = vst [vmem:[%s108] sm:$0xf] %v109
  %s111 = scalar_lea.vmem %s1, 92
  %v112 = vpack.c.bf16 0.0, %v35
  %113 = vst [vmem:[%s111] sm:$0xf] %v112
  %s114 = scalar_lea.vmem %s1, 108
  %v115 = vpack.c.bf16 0.0, %v35
  %116 = vst [vmem:[%s114] sm:$0xf] %v115
  %s117 = scalar_lea.vmem %s1, 124
  %v118 = vpack.c.bf16 0.0, %v35
  %119 = vst [vmem:[%s117] sm:$0xf] %v118
  %s120 = scalar_lea.vmem %s1, 140
  %v121 = vpack.c.bf16 0.0, %v35
  %122 = vst [vmem:[%s120] sm:$0xf] %v121
  %s123 = scalar_lea.vmem %s1, 156
  %v124 = vpack.c.bf16 0.0, %v35
  %125 = vst [vmem:[%s123] sm:$0xf] %v124

// kernel: tile.9
$region0: #{tile.9}
  %s0 = inlined_call_operand.vmem [shape: bf16[10,16,10,2], index: 0, kind: input, shape index: {}]
  %s1 = inlined_call_operand.vmem [shape: bf16[160,20], index: 1, kind: output, shape index: {}]
  $region1: #{tile.9} parent=0
    #allocation0 [shape = 'u8[24576]{0}', space=vmem, size = 0x6000, scoped, tag = 'scoped mem for output reshape']
    #allocation1 [shape = 'u8[163840]{0}', space=vmem, size = 0x28000, scoped, tag = 'scoped mem for input reshape']
    %s3 = ssub.s32 256, 1
    %s4 = scalar_lea.vmem %s0, 156
    %s5 = sshrl.u32 %s3, 1
    %s6 = sor.u32 %s3, %s5
    %s7 = sand.u32 %s6, 85
    %s8 = sshrl.u32 %s7, 1
    %s9 = sor.u32 %s7, %s8
    %s10 = sand.u32 51, %s9
    %s11 = sshrl.u32 %s10, 2
    %s12 = sor.u32 %s10, %s11
    %s13 = sand.u32 15, %s12
    %v14 = vld [vmem:[%s4] sm:%s13]
    %v15 = vunpack.c.l.bf16 %v14
    %v16 = vunpack.c.h.bf16 %v14
    %s17 = scalar_lea.vmem [#allocation1], 312
    %18 = vst [vmem:[%s17] sm:%s3] %v15
    %s19 = scalar_lea.vmem %s0, 152
    %s20 = sshrl.u32 %s3, 1
    %s21 = sor.u32 %s3, %s20
    %s22 = sand.u32 %s21, 85
    %s23 = sshrl.u32 %s22, 1
    %s24 = sor.u32 %s22, %s23
    %s25 = sand.u32 51, %s24
    %s26 = sshrl.u32 %s25, 2
    %s27 = sor.u32 %s25, %s26
    %s28 = sand.u32 15, %s27
    %v29 = vld [vmem:[%s19] sm:%s28]
    %v30 = vunpack.c.l.bf16 %v29
    %v31 = vunpack.c.h.bf16 %v29
    %s32 = scalar_lea.vmem [#allocation1], 304
    %33 = vst [vmem:[%s32] sm:%s3] %v30
    %s34 = scalar_lea.vmem %s0, 148
    %s35 = sshrl.u32 %s3, 1
    %s36 = sor.u32 %s3, %s35
    %s37 = sand.u32 %s36, 85
    %s38 = sshrl.u32 %s37, 1
    %s39 = sor.u32 %s37, %s38
    %s40 = sand.u32 51, %s39
    %s41 = sshrl.u32 %s40, 2
    %s42 = sor.u32 %s40, %s41
    %s43 = sand.u32 15, %s42
    %v44 = vld [vmem:[%s34] sm:%s43]
    %v45 = vunpack.c.l.bf16 %v44
    %v46 = vunpack.c.h.bf16 %v44
    %s47 = scalar_lea.vmem [#allocation1], 296
    %48 = vst [vmem:[%s47] sm:%s3] %v45
    %s49 = scalar_lea.vmem %s0, 144
    %s50 = sshrl.u32 %s3, 1
    %s51 = sor.u32 %s3, %s50
    %s52 = sand.u32 %s51, 85
    %s53 = sshrl.u32 %s52, 1
    %s54 = sor.u32 %s52, %s53
    %s55 = sand.u32 51, %s54
    %s56 = sshrl.u32 %s55, 2
    %s57 = sor.u32 %s55, %s56
    %s58 = sand.u32 15, %s57
    %v59 = vld [vmem:[%s49] sm:%s58]
    %v60 = vunpack.c.l.bf16 %v59
    %v61 = vunpack.c.h.bf16 %v59
    %s62 = scalar_lea.vmem [#allocation1], 288
    %63 = vst [vmem:[%s62] sm:%s3] %v60
    %s64 = scalar_lea.vmem %s0, 140
    %s65 = sshrl.u32 %s3, 1
    %s66 = sor.u32 %s3, %s65
    %s67 = sand.u32 %s66, 85
    %s68 = sshrl.u32 %s67, 1
    %s69 = sor.u32 %s67, %s68
    %s70 = sand.u32 51, %s69
    %s71 = sshrl.u32 %s70, 2
    %s72 = sor.u32 %s70, %s71
    %s73 = sand.u32 15, %s72
    %v74 = vld [vmem:[%s64] sm:%s73]
    %v75 = vunpack.c.l.bf16 %v74
    %v76 = vunpack.c.h.bf16 %v74
    %s77 = scalar_lea.vmem [#allocation1], 280
    %78 = vst [vmem:[%s77] sm:%s3] %v75
    %s79 = scalar_lea.vmem %s0, 136
    %s80 = sshrl.u32 %s3, 1
    %s81 = sor.u32 %s3, %s80
    %s82 = sand.u32 %s81, 85
    %s83 = sshrl.u32 %s82, 1
    %s84 = sor.u32 %s82, %s83
    %s85 = sand.u32 51, %s84
    %s86 = sshrl.u32 %s85, 2
    %s87 = sor.u32 %s85, %s86
    %s88 = sand.u32 15, %s87
    %v89 = vld [vmem:[%s79] sm:%s88]
    %v90 = vunpack.c.l.bf16 %v89
    %v91 = vunpack.c.h.bf16 %v89
    %s92 = scalar_lea.vmem [#allocation1], 272
    %93 = vst [vmem:[%s92] sm:%s3] %v90
    %s94 = scalar_lea.vmem %s0, 132
    %s95 = sshrl.u32 %s3, 1
    %s96 = sor.u32 %s3, %s95
    %s97 = sand.u32 %s96, 85
    %s98 = sshrl.u32 %s97, 1
    %s99 = sor.u32 %s97, %s98
    %s100 = sand.u32 51, %s99
    %s101 = sshrl.u32 %s100, 2
    %s102 = sor.u32 %s100, %s101
    %s103 = sand.u32 15, %s102
    %v104 = vld [vmem:[%s94] sm:%s103]
    %v105 = vunpack.c.l.bf16 %v104
    %v106 = vunpack.c.h.bf16 %v104
    %s107 = scalar_lea.vmem [#allocation1], 264
    %108 = vst [vmem:[%s107] sm:%s3] %v105
    %s109 = scalar_lea.vmem %s0, 128
    %s110 = sshrl.u32 %s3, 1
    %s111 = sor.u32 %s3, %s110
    %s112 = sand.u32 %s111, 85
    %s113 = sshrl.u32 %s112, 1
    %s114 = sor.u32 %s112, %s113
    %s115 = sand.u32 51, %s114
    %s116 = sshrl.u32 %s115, 2
    %s117 = sor.u32 %s115, %s116
    %s118 = sand.u32 15, %s117
    %v119 = vld [vmem:[%s109] sm:%s118]
    %v120 = vunpack.c.l.bf16 %v119
    %v121 = vunpack.c.h.bf16 %v119
    %s122 = scalar_lea.vmem [#allocation1], 256
    %123 = vst [vmem:[%s122] sm:%s3] %v120
    %s124 = scalar_lea.vmem %s0, 124
    %s125 = sshrl.u32 %s3, 1
    %s126 = sor.u32 %s3, %s125
    %s127 = sand.u32 %s126, 85
    %s128 = sshrl.u32 %s127, 1
    %s129 = sor.u32 %s127, %s128
    %s130 = sand.u32 51, %s129
    %s131 = sshrl.u32 %s130, 2
    %s132 = sor.u32 %s130, %s131
    %s133 = sand.u32 15, %s132
    %v134 = vld [vmem:[%s124] sm:%s133]
    %v135 = vunpack.c.l.bf16 %v134
    %v136 = vunpack.c.h.bf16 %v134
    %s137 = scalar_lea.vmem [#allocation1], 248
    %138 = vst [vmem:[%s137] sm:%s3] %v135
    %s139 = scalar_lea.vmem %s0, 120
    %s140 = sshrl.u32 %s3, 1
    %s141 = sor.u32 %s3, %s140
    %s142 = sand.u32 %s141, 85
    %s143 = sshrl.u32 %s142, 1
    %s144 = sor.u32 %s142, %s143
    %s145 = sand.u32 51, %s144
    %s146 = sshrl.u32 %s145, 2
    %s147 = sor.u32 %s145, %s146
    %s148 = sand.u32 15, %s147
    %v149 = vld [vmem:[%s139] sm:%s148]
    %v150 = vunpack.c.l.bf16 %v149
    %v151 = vunpack.c.h.bf16 %v149
    %s152 = scalar_lea.vmem [#allocation1], 240
    %153 = vst [vmem:[%s152] sm:%s3] %v150
    %s154 = scalar_lea.vmem %s0, 116
    %s155 = sshrl.u32 %s3, 1
    %s156 = sor.u32 %s3, %s155
    %s157 = sand.u32 %s156, 85
    %s158 = sshrl.u32 %s157, 1
    %s159 = sor.u32 %s157, %s158
    %s160 = sand.u32 51, %s159
    %s161 = sshrl.u32 %s160, 2
    %s162 = sor.u32 %s160, %s161
    %s163 = sand.u32 15, %s162
    %v164 = vld [vmem:[%s154] sm:%s163]
    %v165 = vunpack.c.l.bf16 %v164
    %v166 = vunpack.c.h.bf16 %v164
    %s167 = scalar_lea.vmem [#allocation1], 232
    %168 = vst [vmem:[%s167] sm:%s3] %v165
    %s169 = scalar_lea.vmem %s0, 112
    %s170 = sshrl.u32 %s3, 1
    %s171 = sor.u32 %s3, %s170
    %s172 = sand.u32 %s171, 85
    %s173 = sshrl.u32 %s172, 1
    %s174 = sor.u32 %s172, %s173
    %s175 = sand.u32 51, %s174
    %s176 = sshrl.u32 %s175, 2
    %s177 = sor.u32 %s175, %s176
    %s178 = sand.u32 15, %s177
    %v179 = vld [vmem:[%s169] sm:%s178]
    %v180 = vunpack.c.l.bf16 %v179
    %v181 = vunpack.c.h.bf16 %v179
    %s182 = scalar_lea.vmem [#allocation1], 224
    %183 = vst [vmem:[%s182] sm:%s3] %v180
    %s184 = scalar_lea.vmem %s0, 108
    %s185 = sshrl.u32 %s3, 1
    %s186 = sor.u32 %s3, %s185
    %s187 = sand.u32 %s186, 85
    %s188 = sshrl.u32 %s187, 1
    %s189 = sor.u32 %s187, %s188
    %s190 = sand.u32 51, %s189
    %s191 = sshrl.u32 %s190, 2
    %s192 = sor.u32 %s190, %s191
    %s193 = sand.u32 15, %s192
    %v194 = vld [vmem:[%s184] sm:%s193]
    %v195 = vunpack.c.l.bf16 %v194
    %v196 = vunpack.c.h.bf16 %v194
    %s197 = scalar_lea.vmem [#allocation1], 216
    %198 = vst [vmem:[%s197] sm:%s3] %v195
    %s199 = scalar_lea.vmem %s0, 104
    %s200 = sshrl.u32 %s3, 1
    %s201 = sor.u32 %s3, %s200
    %s202 = sand.u32 %s201, 85
    %s203 = sshrl.u32 %s202, 1
    %s204 = sor.u32 %s202, %s203
    %s205 = sand.u32 51, %s204
    %s206 = sshrl.u32 %s205, 2
    %s207 = sor.u32 %s205, %s206
    %s208 = sand.u32 15, %s207
    %v209 = vld [vmem:[%s199] sm:%s208]
    %v210 = vunpack.c.l.bf16 %v209
    %v211 = vunpack.c.h.bf16 %v209
    %s212 = scalar_lea.vmem [#allocation1], 208
    %213 = vst [vmem:[%s212] sm:%s3] %v210
    %s214 = scalar_lea.vmem %s0, 100
    %s215 = sshrl.u32 %s3, 1
    %s216 = sor.u32 %s3, %s215
    %s217 = sand.u32 %s216, 85
    %s218 = sshrl.u32 %s217, 1
    %s219 = sor.u32 %s217, %s218
    %s220 = sand.u32 51, %s219
    %s221 = sshrl.u32 %s220, 2
    %s222 = sor.u32 %s220, %s221
    %s223 = sand.u32 15, %s222
    %v224 = vld [vmem:[%s214] sm:%s223]
    %v225 = vunpack.c.l.bf16 %v224
    %v226 = vunpack.c.h.bf16 %v224
    %s227 = scalar_lea.vmem [#allocation1], 200
    %228 = vst [vmem:[%s227] sm:%s3] %v225
    %s229 = scalar_lea.vmem %s0, 96
    %s230 = sshrl.u32 %s3, 1
    %s231 = sor.u32 %s3, %s230
    %s232 = sand.u32 %s231, 85
    %s233 = sshrl.u32 %s232, 1
    %s234 = sor.u32 %s232, %s233
    %s235 = sand.u32 51, %s234
    %s236 = sshrl.u32 %s235, 2
    %s237 = sor.u32 %s235, %s236
    %s238 = sand.u32 15, %s237
    %v239 = vld [vmem:[%s229] sm:%s238]
    %v240 = vunpack.c.l.bf16 %v239
    %v241 = vunpack.c.h.bf16 %v239
    %s242 = scalar_lea.vmem [#allocation1], 192
    %243 = vst [vmem:[%s242] sm:%s3] %v240
    %s244 = scalar_lea.vmem %s0, 92
    %s245 = sshrl.u32 %s3, 1
    %s246 = sor.u32 %s3, %s245
    %s247 = sand.u32 %s246, 85
    %s248 = sshrl.u32 %s247, 1
    %s249 = sor.u32 %s247, %s248
    %s250 = sand.u32 51, %s249
    %s251 = sshrl.u32 %s250, 2
    %s252 = sor.u32 %s250, %s251
    %s253 = sand.u32 15, %s252
    %v254 = vld [vmem:[%s244] sm:%s253]
    %v255 = vunpack.c.l.bf16 %v254
    %v256 = vunpack.c.h.bf16 %v254
    %s257 = scalar_lea.vmem [#allocation1], 184
    %258 = vst [vmem:[%s257] sm:%s3] %v255
    %s259 = scalar_lea.vmem %s0, 88
    %s260 = sshrl.u32 %s3, 1
    %s261 = sor.u32 %s3, %s260
    %s262 = sand.u32 %s261, 85
    %s263 = sshrl.u32 %s262, 1
    %s264 = sor.u32 %s262, %s263
    %s265 = sand.u32 51, %s264
    %s266 = sshrl.u32 %s265, 2
    %s267 = sor.u32 %s265, %s266
    %s268 = sand.u32 15, %s267
    %v269 = vld [vmem:[%s259] sm:%s268]
    %v270 = vunpack.c.l.bf16 %v269
    %v271 = vunpack.c.h.bf16 %v269
    %s272 = scalar_lea.vmem [#allocation1], 176
    %273 = vst [vmem:[%s272] sm:%s3] %v270
    %s274 = scalar_lea.vmem %s0, 84
    %s275 = sshrl.u32 %s3, 1
    %s276 = sor.u32 %s3, %s275
    %s277 = sand.u32 %s276, 85
    %s278 = sshrl.u32 %s277, 1
    %s279 = sor.u32 %s277, %s278
    %s280 = sand.u32 51, %s279
    %s281 = sshrl.u32 %s280, 2
    %s282 = sor.u32 %s280, %s281
    %s283 = sand.u32 15, %s282
    %v284 = vld [vmem:[%s274] sm:%s283]
    %v285 = vunpack.c.l.bf16 %v284
    %v286 = vunpack.c.h.bf16 %v284
    %s287 = scalar_lea.vmem [#allocation1], 168
    %288 = vst [vmem:[%s287] sm:%s3] %v285
    %s289 = scalar_lea.vmem %s0, 80
    %s290 = sshrl.u32 %s3, 1
    %s291 = sor.u32 %s3, %s290
    %s292 = sand.u32 %s291, 85
    %s293 = sshrl.u32 %s292, 1
    %s294 = sor.u32 %s292, %s293
    %s295 = sand.u32 51, %s294
    %s296 = sshrl.u32 %s295, 2
    %s297 = sor.u32 %s295, %s296
    %s298 = sand.u32 15, %s297
    %v299 = vld [vmem:[%s289] sm:%s298]
    %v300 = vunpack.c.l.bf16 %v299
    %v301 = vunpack.c.h.bf16 %v299
    %s302 = scalar_lea.vmem [#allocation1], 160
    %303 = vst [vmem:[%s302] sm:%s3] %v300
    %s304 = scalar_lea.vmem %s0, 76
    %s305 = sshrl.u32 %s3, 1
    %s306 = sor.u32 %s3, %s305
    %s307 = sand.u32 %s306, 85
    %s308 = sshrl.u32 %s307, 1
    %s309 = sor.u32 %s307, %s308
    %s310 = sand.u32 51, %s309
    %s311 = sshrl.u32 %s310, 2
    %s312 = sor.u32 %s310, %s311
    %s313 = sand.u32 15, %s312
    %v314 = vld [vmem:[%s304] sm:%s313]
    %v315 = vunpack.c.l.bf16 %v314
    %v316 = vunpack.c.h.bf16 %v314
    %s317 = scalar_lea.vmem [#allocation1], 152
    %318 = vst [vmem:[%s317] sm:%s3] %v315
    %s319 = scalar_lea.vmem %s0, 72
    %s320 = sshrl.u32 %s3, 1
    %s321 = sor.u32 %s3, %s320
    %s322 = sand.u32 %s321, 85
    %s323 = sshrl.u32 %s322, 1
    %s324 = sor.u32 %s322, %s323
    %s325 = sand.u32 51, %s324
    %s326 = sshrl.u32 %s325, 2
    %s327 = sor.u32 %s325, %s326
    %s328 = sand.u32 15, %s327
    %v329 = vld [vmem:[%s319] sm:%s328]
    %v330 = vunpack.c.l.bf16 %v329
    %v331 = vunpack.c.h.bf16 %v329
    %s332 = scalar_lea.vmem [#allocation1], 144
    %333 = vst [vmem:[%s332] sm:%s3] %v330
    %s334 = scalar_lea.vmem %s0, 68
    %s335 = sshrl.u32 %s3, 1
    %s336 = sor.u32 %s3, %s335
    %s337 = sand.u32 %s336, 85
    %s338 = sshrl.u32 %s337, 1
    %s339 = sor.u32 %s337, %s338
    %s340 = sand.u32 51, %s339
    %s341 = sshrl.u32 %s340, 2
    %s342 = sor.u32 %s340, %s341
    %s343 = sand.u32 15, %s342
    %v344 = vld [vmem:[%s334] sm:%s343]
    %v345 = vunpack.c.l.bf16 %v344
    %v346 = vunpack.c.h.bf16 %v344
    %s347 = scalar_lea.vmem [#allocation1], 136
    %348 = vst [vmem:[%s347] sm:%s3] %v345
    %s349 = scalar_lea.vmem %s0, 64
    %s350 = sshrl.u32 %s3, 1
    %s351 = sor.u32 %s3, %s350
    %s352 = sand.u32 %s351, 85
    %s353 = sshrl.u32 %s352, 1
    %s354 = sor.u32 %s352, %s353
    %s355 = sand.u32 51, %s354
    %s356 = sshrl.u32 %s355, 2
    %s357 = sor.u32 %s355, %s356
    %s358 = sand.u32 15, %s357
    %v359 = vld [vmem:[%s349] sm:%s358]
    %v360 = vunpack.c.l.bf16 %v359
    %v361 = vunpack.c.h.bf16 %v359
    %s362 = scalar_lea.vmem [#allocation1], 128
    %363 = vst [vmem:[%s362] sm:%s3] %v360
    %s364 = scalar_lea.vmem %s0, 60
    %s365 = sshrl.u32 %s3, 1
    %s366 = sor.u32 %s3, %s365
    %s367 = sand.u32 %s366, 85
    %s368 = sshrl.u32 %s367, 1
    %s369 = sor.u32 %s367, %s368
    %s370 = sand.u32 51, %s369
    %s371 = sshrl.u32 %s370, 2
    %s372 = sor.u32 %s370, %s371
    %s373 = sand.u32 15, %s372
    %v374 = vld [vmem:[%s364] sm:%s373]
    %v375 = vunpack.c.l.bf16 %v374
    %v376 = vunpack.c.h.bf16 %v374
    %s377 = scalar_lea.vmem [#allocation1], 120
    %378 = vst [vmem:[%s377] sm:%s3] %v375
    %s379 = scalar_lea.vmem %s0, 56
    %s380 = sshrl.u32 %s3, 1
    %s381 = sor.u32 %s3, %s380
    %s382 = sand.u32 %s381, 85
    %s383 = sshrl.u32 %s382, 1
    %s384 = sor.u32 %s382, %s383
    %s385 = sand.u32 51, %s384
    %s386 = sshrl.u32 %s385, 2
    %s387 = sor.u32 %s385, %s386
    %s388 = sand.u32 15, %s387
    %v389 = vld [vmem:[%s379] sm:%s388]
    %v390 = vunpack.c.l.bf16 %v389
    %v391 = vunpack.c.h.bf16 %v389
    %s392 = scalar_lea.vmem [#allocation1], 112
    %393 = vst [vmem:[%s392] sm:%s3] %v390
    %s394 = scalar_lea.vmem %s0, 52
    %s395 = sshrl.u32 %s3, 1
    %s396 = sor.u32 %s3, %s395
    %s397 = sand.u32 %s396, 85
    %s398 = sshrl.u32 %s397, 1
    %s399 = sor.u32 %s397, %s398
    %s400 = sand.u32 51, %s399
    %s401 = sshrl.u32 %s400, 2
    %s402 = sor.u32 %s400, %s401
    %s403 = sand.u32 15, %s402
    %v404 = vld [vmem:[%s394] sm:%s403]
    %v405 = vunpack.c.l.bf16 %v404
    %v406 = vunpack.c.h.bf16 %v404
    %s407 = scalar_lea.vmem [#allocation1], 104
    %408 = vst [vmem:[%s407] sm:%s3] %v405
    %s409 = scalar_lea.vmem %s0, 48
    %s410 = sshrl.u32 %s3, 1
    %s411 = sor.u32 %s3, %s410
    %s412 = sand.u32 %s411, 85
    %s413 = sshrl.u32 %s412, 1
    %s414 = sor.u32 %s412, %s413
    %s415 = sand.u32 51, %s414
    %s416 = sshrl.u32 %s415, 2
    %s417 = sor.u32 %s415, %s416
    %s418 = sand.u32 15, %s417
    %v419 = vld [vmem:[%s409] sm:%s418]
    %v420 = vunpack.c.l.bf16 %v419
    %v421 = vunpack.c.h.bf16 %v419
    %s422 = scalar_lea.vmem [#allocation1], 96
    %423 = vst [vmem:[%s422] sm:%s3] %v420
    %s424 = scalar_lea.vmem %s0, 44
    %s425 = sshrl.u32 %s3, 1
    %s426 = sor.u32 %s3, %s425
    %s427 = sand.u32 %s426, 85
    %s428 = sshrl.u32 %s427, 1
    %s429 = sor.u32 %s427, %s428
    %s430 = sand.u32 51, %s429
    %s431 = sshrl.u32 %s430, 2
    %s432 = sor.u32 %s430, %s431
    %s433 = sand.u32 15, %s432
    %v434 = vld [vmem:[%s424] sm:%s433]
    %v435 = vunpack.c.l.bf16 %v434
    %v436 = vunpack.c.h.bf16 %v434
    %s437 = scalar_lea.vmem [#allocation1], 88
    %438 = vst [vmem:[%s437] sm:%s3] %v435
    %s439 = scalar_lea.vmem %s0, 40
    %s440 = sshrl.u32 %s3, 1
    %s441 = sor.u32 %s3, %s440
    %s442 = sand.u32 %s441, 85
    %s443 = sshrl.u32 %s442, 1
    %s444 = sor.u32 %s442, %s443
    %s445 = sand.u32 51, %s444
    %s446 = sshrl.u32 %s445, 2
    %s447 = sor.u32 %s445, %s446
    %s448 = sand.u32 15, %s447
    %v449 = vld [vmem:[%s439] sm:%s448]
    %v450 = vunpack.c.l.bf16 %v449
    %v451 = vunpack.c.h.bf16 %v449
    %s452 = scalar_lea.vmem [#allocation1], 80
    %453 = vst [vmem:[%s452] sm:%s3] %v450
    %s454 = scalar_lea.vmem %s0, 36
    %s455 = sshrl.u32 %s3, 1
    %s456 = sor.u32 %s3, %s455
    %s457 = sand.u32 %s456, 85
    %s458 = sshrl.u32 %s457, 1
    %s459 = sor.u32 %s457, %s458
    %s460 = sand.u32 51, %s459
    %s461 = sshrl.u32 %s460, 2
    %s462 = sor.u32 %s460, %s461
    %s463 = sand.u32 15, %s462
    %v464 = vld [vmem:[%s454] sm:%s463]
    %v465 = vunpack.c.l.bf16 %v464
    %v466 = vunpack.c.h.bf16 %v464
    %s467 = scalar_lea.vmem [#allocation1], 72
    %468 = vst [vmem:[%s467] sm:%s3] %v465
    %s469 = scalar_lea.vmem %s0, 32
    %s470 = sshrl.u32 %s3, 1
    %s471 = sor.u32 %s3, %s470
    %s472 = sand.u32 %s471, 85
    %s473 = sshrl.u32 %s472, 1
    %s474 = sor.u32 %s472, %s473
    %s475 = sand.u32 51, %s474
    %s476 = sshrl.u32 %s475, 2
    %s477 = sor.u32 %s475, %s476
    %s478 = sand.u32 15, %s477
    %v479 = vld [vmem:[%s469] sm:%s478]
    %v480 = vunpack.c.l.bf16 %v479
    %v481 = vunpack.c.h.bf16 %v479
    %s482 = scalar_lea.vmem [#allocation1], 64
    %483 = vst [vmem:[%s482] sm:%s3] %v480
    %s484 = scalar_lea.vmem %s0, 28
    %s485 = sshrl.u32 %s3, 1
    %s486 = sor.u32 %s3, %s485
    %s487 = sand.u32 %s486, 85
    %s488 = sshrl.u32 %s487, 1
    %s489 = sor.u32 %s487, %s488
    %s490 = sand.u32 51, %s489
    %s491 = sshrl.u32 %s490, 2
    %s492 = sor.u32 %s490, %s491
    %s493 = sand.u32 15, %s492
    %v494 = vld [vmem:[%s484] sm:%s493]
    %v495 = vunpack.c.l.bf16 %v494
    %v496 = vunpack.c.h.bf16 %v494
    %s497 = scalar_lea.vmem [#allocation1], 56
    %498 = vst [vmem:[%s497] sm:%s3] %v495
    %s499 = scalar_lea.vmem %s0, 24
    %s500 = sshrl.u32 %s3, 1
    %s501 = sor.u32 %s3, %s500
    %s502 = sand.u32 %s501, 85
    %s503 = sshrl.u32 %s502, 1
    %s504 = sor.u32 %s502, %s503
    %s505 = sand.u32 51, %s504
    %s506 = sshrl.u32 %s505, 2
    %s507 = sor.u32 %s505, %s506
    %s508 = sand.u32 15, %s507
    %v509 = vld [vmem:[%s499] sm:%s508]
    %v510 = vunpack.c.l.bf16 %v509
    %v511 = vunpack.c.h.bf16 %v509
    %s512 = scalar_lea.vmem [#allocation1], 48
    %513 = vst [vmem:[%s512] sm:%s3] %v510
    %s514 = scalar_lea.vmem %s0, 20
    %s515 = sshrl.u32 %s3, 1
    %s516 = sor.u32 %s3, %s515
    %s517 = sand.u32 %s516, 85
    %s518 = sshrl.u32 %s517, 1
    %s519 = sor.u32 %s517, %s518
    %s520 = sand.u32 51, %s519
    %s521 = sshrl.u32 %s520, 2
    %s522 = sor.u32 %s520, %s521
    %s523 = sand.u32 15, %s522
    %v524 = vld [vmem:[%s514] sm:%s523]
    %v525 = vunpack.c.l.bf16 %v524
    %v526 = vunpack.c.h.bf16 %v524
    %s527 = scalar_lea.vmem [#allocation1], 40
    %528 = vst [vmem:[%s527] sm:%s3] %v525
    %s529 = scalar_lea.vmem %s0, 16
    %s530 = sshrl.u32 %s3, 1
    %s531 = sor.u32 %s3, %s530
    %s532 = sand.u32 %s531, 85
    %s533 = sshrl.u32 %s532, 1
    %s534 = sor.u32 %s532, %s533
    %s535 = sand.u32 51, %s534
    %s536 = sshrl.u32 %s535, 2
    %s537 = sor.u32 %s535, %s536
    %s538 = sand.u32 15, %s537
    %v539 = vld [vmem:[%s529] sm:%s538]
    %v540 = vunpack.c.l.bf16 %v539
    %v541 = vunpack.c.h.bf16 %v539
    %s542 = scalar_lea.vmem [#allocation1], 32
    %543 = vst [vmem:[%s542] sm:%s3] %v540
    %s544 = scalar_lea.vmem %s0, 12
    %s545 = sshrl.u32 %s3, 1
    %s546 = sor.u32 %s3, %s545
    %s547 = sand.u32 %s546, 85
    %s548 = sshrl.u32 %s547, 1
    %s549 = sor.u32 %s547, %s548
    %s550 = sand.u32 51, %s549
    %s551 = sshrl.u32 %s550, 2
    %s552 = sor.u32 %s550, %s551
    %s553 = sand.u32 15, %s552
    %v554 = vld [vmem:[%s544] sm:%s553]
    %v555 = vunpack.c.l.bf16 %v554
    %v556 = vunpack.c.h.bf16 %v554
    %s557 = scalar_lea.vmem [#allocation1], 24
    %558 = vst [vmem:[%s557] sm:%s3] %v555
    %s559 = scalar_lea.vmem %s0, 8
    %s560 = sshrl.u32 %s3, 1
    %s561 = sor.u32 %s3, %s560
    %s562 = sand.u32 %s561, 85
    %s563 = sshrl.u32 %s562, 1
    %s564 = sor.u32 %s562, %s563
    %s565 = sand.u32 51, %s564
    %s566 = sshrl.u32 %s565, 2
    %s567 = sor.u32 %s565, %s566
    %s568 = sand.u32 15, %s567
    %v569 = vld [vmem:[%s559] sm:%s568]
    %v570 = vunpack.c.l.bf16 %v569
    %v571 = vunpack.c.h.bf16 %v569
    %s572 = scalar_lea.vmem [#allocation1], 16
    %573 = vst [vmem:[%s572] sm:%s3] %v570
    %s574 = scalar_lea.vmem %s0, 4
    %s575 = sshrl.u32 %s3, 1
    %s576 = sor.u32 %s3, %s575
    %s577 = sand.u32 %s576, 85
    %s578 = sshrl.u32 %s577, 1
    %s579 = sor.u32 %s577, %s578
    %s580 = sand.u32 51, %s579
    %s581 = sshrl.u32 %s580, 2
    %s582 = sor.u32 %s580, %s581
    %s583 = sand.u32 15, %s582
    %v584 = vld [vmem:[%s574] sm:%s583]
    %v585 = vunpack.c.l.bf16 %v584
    %v586 = vunpack.c.h.bf16 %v584
    %s587 = scalar_lea.vmem [#allocation1], 8
    %588 = vst [vmem:[%s587] sm:%s3] %v585
    %s589 = sshrl.u32 %s3, 1
    %s590 = sor.u32 %s3, %s589
    %s591 = sand.u32 %s590, 85
    %s592 = sshrl.u32 %s591, 1
    %s593 = sor.u32 %s591, %s592
    %s594 = sand.u32 51, %s593
    %s595 = sshrl.u32 %s594, 2
    %s596 = sor.u32 %s594, %s595
    %s597 = sand.u32 15, %s596
    %v598 = vld [vmem:[%s0] sm:%s597]
    %v599 = vunpack.c.l.bf16 %v598
    %v600 = vunpack.c.h.bf16 %v598
    %601 = vst [vmem:[#allocation1] sm:%s3] %v599
    %v602 = vld [vmem:[#allocation1] ss:$8 sm:$0xf]
    %v603 = vld [vmem:[#allocation1] ss:$8 sm:$0xf0]
    %vm604 = vcmask 1047556
    %v605 = vsel %vm604, %v603, %v602
    %vm606 = vcmask 130048
    %607 = vst.msk [vmem:[#allocation0] ss:$8 sm:$0x3] %vm606, %v605
    %s608 = scalar_lea.vmem [#allocation0], 4294967281
    %609 = vst.msk [vmem:[%s608] ss:$8 sm:$0xc] %vm606, %v605
    %s610 = scalar_lea.vmem [#allocation0], 4294967266
    %611 = vst.msk [vmem:[%s610] ss:$8 sm:$0x30] %vm606, %v605
    %s612 = scalar_lea.vmem [#allocation0], 4294967251
    %613 = vst.msk [vmem:[%s612] ss:$8 sm:$0xc0] %vm606, %v605
    %s614 = scalar_lea.vmem [#allocation1], 64
    %v615 = vld [vmem:[%s614] ss:$8 sm:$0xf]
    %s616 = scalar_lea.vmem [#allocation1], 64
    %v617 = vld [vmem:[%s616] ss:$8 sm:$0xf0]
    %vm618 = vcmask 1047556
    %v619 = vsel %vm618, %v617, %v615
    %vm620 = vcmask 130048
    %s621 = scalar_lea.vmem [#allocation0], 4
    %622 = vst.msk [vmem:[%s621] ss:$8 sm:$0x3] %vm620, %v619
    %s623 = scalar_lea.vmem [#allocation0], 4294967285
    %624 = vst.msk [vmem:[%s623] ss:$8 sm:$0xc] %vm620, %v619
    %s625 = scalar_lea.vmem [#allocation0], 4294967270
    %626 = vst.msk [vmem:[%s625] ss:$8 sm:$0x30] %vm620, %v619
    %s627 = scalar_lea.vmem [#allocation0], 4294967255
    %628 = vst.msk [vmem:[%s627] ss:$8 sm:$0xc0] %vm620, %v619
    %s629 = scalar_lea.vmem [#allocation1], 128
    %v630 = vld [vmem:[%s629] ss:$8 sm:$0xf]
    %s631 = scalar_lea.vmem [#allocation1], 128
    %v632 = vld [vmem:[%s631] ss:$8 sm:$0xf0]
    %vm633 = vcmask 1047556
    %v634 = vsel %vm633, %v632, %v630
    %vm635 = vcmask 130048
    %s636 = scalar_lea.vmem [#allocation0], 16
    %637 = vst.msk [vmem:[%s636] ss:$8 sm:$0x3] %vm635, %v634
    %s638 = scalar_lea.vmem [#allocation0], 1
    %639 = vst.msk [vmem:[%s638] ss:$8 sm:$0xc] %vm635, %v634
    %s640 = scalar_lea.vmem [#allocation0], 4294967282
    %641 = vst.msk [vmem:[%s640] ss:$8 sm:$0x30] %vm635, %v634
    %s642 = scalar_lea.vmem [#allocation0], 4294967267
    %643 = vst.msk [vmem:[%s642] ss:$8 sm:$0xc0] %vm635, %v634
    %s644 = scalar_lea.vmem [#allocation1], 192
    %v645 = vld [vmem:[%s644] ss:$8 sm:$0xf]
    %s646 = scalar_lea.vmem [#allocation1], 192
    %v647 = vld [vmem:[%s646] ss:$8 sm:$0xf0]
    %vm648 = vcmask 1047556
    %v649 = vsel %vm648, %v647, %v645
    %vm650 = vcmask 130048
    %s651 = scalar_lea.vmem [#allocation0], 20
    %652 = vst.msk [vmem:[%s651] ss:$8 sm:$0x3] %vm650, %v649
    %s653 = scalar_lea.vmem [#allocation0], 5
    %654 = vst.msk [vmem:[%s653] ss:$8 sm:$0xc] %vm650, %v649
    %s655 = scalar_lea.vmem [#allocation0], 4294967286
    %656 = vst.msk [vmem:[%s655] ss:$8 sm:$0x30] %vm650, %v649
    %s657 = scalar_lea.vmem [#allocation0], 4294967271
    %658 = vst.msk [vmem:[%s657] ss:$8 sm:$0xc0] %vm650, %v649
    %s659 = scalar_lea.vmem [#allocation1], 256
    %v660 = vld [vmem:[%s659] ss:$8 sm:$0xf]
    %s661 = scalar_lea.vmem [#allocation1], 256
    %v662 = vld [vmem:[%s661] ss:$8 sm:$0xf0]
    %vm663 = vcmask 1047556
    %v664 = vsel %vm663, %v662, %v660
    %vm665 = vcmask 130048
    %s666 = scalar_lea.vmem [#allocation0], 32
    %667 = vst.msk [vmem:[%s666] ss:$8 sm:$0x3] %vm665, %v664
    %s668 = scalar_lea.vmem [#allocation0], 17
    %669 = vst.msk [vmem:[%s668] ss:$8 sm:$0xc] %vm665, %v664
    %s670 = scalar_lea.vmem [#allocation0], 2
    %671 = vst.msk [vmem:[%s670] ss:$8 sm:$0x30] %vm665, %v664
    %s672 = scalar_lea.vmem [#allocation0], 4294967283
    %673 = vst.msk [vmem:[%s672] ss:$8 sm:$0xc0] %vm665, %v664
    %s674 = scalar_lea.vmem [#allocation1], 7
    %s675 = smov 3
    %v676 = vld [vmem:[%s674] ss:$16 sm:%s675]
    %s677 = scalar_lea.vmem [#allocation1], 7
    %s678 = smov 12
    %v679 = vld [vmem:[%s677] ss:$16 sm:%s678]
    %vm680 = vcmask 1043458
    %v681 = vsel %vm680, %v679, %v676
    %s682 = scalar_lea.vmem [#allocation1], 7
    %s683 = smov 48
    %v684 = vld [vmem:[%s682] ss:$16 sm:%s683]
    %vm685 = vcmask 1045508
    %v686 = vsel %vm685, %v684, %v681
    %s687 = scalar_lea.vmem [#allocation1], 7
    %s688 = smov 192
    %v689 = vld [vmem:[%s687] ss:$16 sm:%s688]
    %vm690 = vcmask 1047558
    %v691 = vsel %vm690, %v689, %v686
    %692 = vrot.lane.b32.xlu0 %v691, 112
    %v693 = vpop.permute.xlu0 %692
    %vm694 = vcmask 1048448
    %695 = vst.msk [vmem:[#allocation0] sm:$0xff] %vm694, %v693
    %s696 = scalar_lea.vmem [#allocation1], 263
    %s697 = smov 3
    %v698 = vld [vmem:[%s696] ss:$16 sm:%s697]
    %s699 = scalar_lea.vmem [#allocation1], 263
    %s700 = smov 12
    %v701 = vld [vmem:[%s699] ss:$16 sm:%s700]
    %vm702 = vcmask 1043458
    %v703 = vsel %vm702, %v701, %v698
    %s704 = scalar_lea.vmem [#allocation1], 71
    %s705 = smov 48
    %v706 = vld [vmem:[%s704] ss:$16 sm:%s705]
    %vm707 = vcmask 1045508
    %v708 = vsel %vm707, %v706, %v703
    %s709 = scalar_lea.vmem [#allocation1], 71
    %s710 = smov 192
    %v711 = vld [vmem:[%s709] ss:$16 sm:%s710]
    %vm712 = vcmask 1047558
    %v713 = vsel %vm712, %v711, %v708
    %714 = vrot.lane.b32.xlu0 %v713, 112
    %v715 = vpop.permute.xlu0 %714
    %vm716 = vcmask 1048448
    %s717 = scalar_lea.vmem [#allocation0], 32
    %718 = vst.msk [vmem:[%s717] sm:$0xf] %vm716, %v715
    %s719 = scalar_lea.vmem [#allocation0], 12
    %720 = vst.msk [vmem:[%s719] sm:$0xf0] %vm716, %v715
    %s721 = scalar_lea.vmem [#allocation1], 199
    %s722 = smov 3
    %v723 = vld [vmem:[%s721] ss:$16 sm:%s722]
    %s724 = scalar_lea.vmem [#allocation1], 199
    %s725 = smov 12
    %v726 = vld [vmem:[%s724] ss:$16 sm:%s725]
    %vm727 = vcmask 1043458
    %v728 = vsel %vm727, %v726, %v723
    %729 = vrot.lane.b32.xlu0 %v728, 112
    %v730 = vpop.permute.xlu0 %729
    %vm731 = vcmask 1048448
    %s732 = scalar_lea.vmem [#allocation0], 20
    %733 = vst.msk [vmem:[%s732] sm:$0xf] %vm731, %v730
    %s734 = scalar_lea.vmem [#allocation1], 6
    %s735 = smov 3
    %v736 = vld [vmem:[%s734] ss:$16 sm:%s735]
    %s737 = scalar_lea.vmem [#allocation1], 6
    %s738 = smov 12
    %v739 = vld [vmem:[%s737] ss:$16 sm:%s738]
    %vm740 = vcmask 1043458
    %v741 = vsel %vm740, %v739, %v736
    %s742 = scalar_lea.vmem [#allocation1], 6
    %s743 = smov 48
    %v744 = vld [vmem:[%s742] ss:$16 sm:%s743]
    %vm745 = vcmask 1045508
    %v746 = vsel %vm745, %v744, %v741
    %s747 = scalar_lea.vmem [#allocation1], 6
    %s748 = smov 192
    %v749 = vld [vmem:[%s747] ss:$16 sm:%s748]
    %vm750 = vcmask 1047558
    %v751 = vsel %vm750, %v749, %v746
    %752 = vrot.lane.b32.xlu0 %v751, 96
    %v753 = vpop.permute.xlu0 %752
    %vm754 = vcmask 917248
    %755 = vst.msk [vmem:[#allocation0] sm:$0xff] %vm754, %v753
    %s756 = scalar_lea.vmem [#allocation1], 262
    %s757 = smov 3
    %v758 = vld [vmem:[%s756] ss:$16 sm:%s757]
    %s759 = scalar_lea.vmem [#allocation1], 262
    %s760 = smov 12
    %v761 = vld [vmem:[%s759] ss:$16 sm:%s760]
    %vm762 = vcmask 1043458
    %v763 = vsel %vm762, %v761, %v758
    %s764 = scalar_lea.vmem [#allocation1], 70
    %s765 = smov 48
    %v766 = vld [vmem:[%s764] ss:$16 sm:%s765]
    %vm767 = vcmask 1045508
    %v768 = vsel %vm767, %v766, %v763
    %s769 = scalar_lea.vmem [#allocation1], 70
    %s770 = smov 192
    %v771 = vld [vmem:[%s769] ss:$16 sm:%s770]
    %vm772 = vcmask 1047558
    %v773 = vsel %vm772, %v771, %v768
    %774 = vrot.lane.b32.xlu0 %v773, 96
    %v775 = vpop.permute.xlu0 %774
    %vm776 = vcmask 917248
    %s777 = scalar_lea.vmem [#allocation0], 32
    %778 = vst.msk [vmem:[%s777] sm:$0xf] %vm776, %v775
    %s779 = scalar_lea.vmem [#allocation0], 12
    %780 = vst.msk [vmem:[%s779] sm:$0xf0] %vm776, %v775
    %s781 = scalar_lea.vmem [#allocation1], 198
    %s782 = smov 3
    %v783 = vld [vmem:[%s781] ss:$16 sm:%s782]
    %s784 = scalar_lea.vmem [#allocation1], 198
    %s785 = smov 12
    %v786 = vld [vmem:[%s784] ss:$16 sm:%s785]
    %vm787 = vcmask 1043458
    %v788 = vsel %vm787, %v786, %v783
    %789 = vrot.lane.b32.xlu0 %v788, 96
    %v790 = vpop.permute.xlu0 %789
    %vm791 = vcmask 917248
    %s792 = scalar_lea.vmem [#allocation0], 20
    %793 = vst.msk [vmem:[%s792] sm:$0xf] %vm791, %v790
    %s794 = scalar_lea.vmem [#allocation1], 5
    %s795 = smov 3
    %v796 = vld [vmem:[%s794] ss:$16 sm:%s795]
    %s797 = scalar_lea.vmem [#allocation1], 5
    %s798 = smov 12
    %v799 = vld [vmem:[%s797] ss:$16 sm:%s798]
    %vm800 = vcmask 1043458
    %v801 = vsel %vm800, %v799, %v796
    %s802 = scalar_lea.vmem [#allocation1], 5
    %s803 = smov 48
    %v804 = vld [vmem:[%s802] ss:$16 sm:%s803]
    %vm805 = vcmask 1045508
    %v806 = vsel %vm805, %v804, %v801
    %s807 = scalar_lea.vmem [#allocation1], 5
    %s808 = smov 192
    %v809 = vld [vmem:[%s807] ss:$16 sm:%s808]
    %vm810 = vcmask 1047558
    %v811 = vsel %vm810, %v809, %v806
    %812 = vrot.lane.b32.xlu0 %v811, 80
    %v813 = vpop.permute.xlu0 %812
    %vm814 = vcmask 786048
    %815 = vst.msk [vmem:[#allocation0] sm:$0xff] %vm814, %v813
    %s816 = scalar_lea.vmem [#allocation1], 261
    %s817 = smov 3
    %v818 = vld [vmem:[%s816] ss:$16 sm:%s817]
    %s819 = scalar_lea.vmem [#allocation1], 261
    %s820 = smov 12
    %v821 = vld [vmem:[%s819] ss:$16 sm:%s820]
    %vm822 = vcmask 1043458
    %v823 = vsel %vm822, %v821, %v818
    %s824 = scalar_lea.vmem [#allocation1], 69
    %s825 = smov 48
    %v826 = vld [vmem:[%s824] ss:$16 sm:%s825]
    %vm827 = vcmask 1045508
    %v828 = vsel %vm827, %v826, %v823
    %s829 = scalar_lea.vmem [#allocation1], 69
    %s830 = smov 192
    %v831 = vld [vmem:[%s829] ss:$16 sm:%s830]
    %vm832 = vcmask 1047558
    %v833 = vsel %vm832, %v831, %v828
    %834 = vrot.lane.b32.xlu0 %v833, 80
    %v835 = vpop.permute.xlu0 %834
    %vm836 = vcmask 786048
    %s837 = scalar_lea.vmem [#allocation0], 32
    %838 = vst.msk [vmem:[%s837] sm:$0xf] %vm836, %v835
    %s839 = scalar_lea.vmem [#allocation0], 12
    %840 = vst.msk [vmem:[%s839] sm:$0xf0] %vm836, %v835
    %s841 = scalar_lea.vmem [#allocation1], 197
    %s842 = smov 3
    %v843 = vld [vmem:[%s841] ss:$16 sm:%s842]
    %s844 = scalar_lea.vmem [#allocation1], 197
    %s845 = smov 12
    %v846 = vld [vmem:[%s844] ss:$16 sm:%s845]
    %vm847 = vcmask 1043458
    %v848 = vsel %vm847, %v846, %v843
    %849 = vrot.lane.b32.xlu0 %v848, 80
    %v850 = vpop.permute.xlu0 %849
    %vm851 = vcmask 786048
    %s852 = scalar_lea.vmem [#allocation0], 20
    %853 = vst.msk [vmem:[%s852] sm:$0xf] %vm851, %v850
    %s854 = scalar_lea.vmem [#allocation1], 4
    %s855 = smov 3
    %v856 = vld [vmem:[%s854] ss:$16 sm:%s855]
    %s857 = scalar_lea.vmem [#allocation1], 4
    %s858 = smov 12
    %v859 = vld [vmem:[%s857] ss:$16 sm:%s858]
    %vm860 = vcmask 1043458
    %v861 = vsel %vm860, %v859, %v856
    %s862 = scalar_lea.vmem [#allocation1], 4
    %s863 = smov 48
    %v864 = vld [vmem:[%s862] ss:$16 sm:%s863]
    %vm865 = vcmask 1045508
    %v866 = vsel %vm865, %v864, %v861
    %s867 = scalar_lea.vmem [#allocation1], 4
    %s868 = smov 192
    %v869 = vld [vmem:[%s867] ss:$16 sm:%s868]
    %vm870 = vcmask 1047558
    %v871 = vsel %vm870, %v869, %v866
    %872 = vrot.lane.b32.xlu0 %v871, 64
    %v873 = vpop.permute.xlu0 %872
    %vm874 = vcmask 654848
    %875 = vst.msk [vmem:[#allocation0] sm:$0xff] %vm874, %v873
    %s876 = scalar_lea.vmem [#allocation1], 260
    %s877 = smov 3
    %v878 = vld [vmem:[%s876] ss:$16 sm:%s877]
    %s879 = scalar_lea.vmem [#allocation1], 260
    %s880 = smov 12
    %v881 = vld [vmem:[%s879] ss:$16 sm:%s880]
    %vm882 = vcmask 1043458
    %v883 = vsel %vm882, %v881, %v878
    %s884 = scalar_lea.vmem [#allocation1], 68
    %s885 = smov 48
    %v886 = vld [vmem:[%s884] ss:$16 sm:%s885]
    %vm887 = vcmask 1045508
    %v888 = vsel %vm887, %v886, %v883
    %s889 = scalar_lea.vmem [#allocation1], 68
    %s890 = smov 192
    %v891 = vld [vmem:[%s889] ss:$16 sm:%s890]
    %vm892 = vcmask 1047558
    %v893 = vsel %vm892, %v891, %v888
    %894 = vrot.lane.b32.xlu0 %v893, 64
    %v895 = vpop.permute.xlu0 %894
    %vm896 = vcmask 654848
    %s897 = scalar_lea.vmem [#allocation0], 32
    %898 = vst.msk [vmem:[%s897] sm:$0xf] %vm896, %v895
    %s899 = scalar_lea.vmem [#allocation0], 12
    %900 = vst.msk [vmem:[%s899] sm:$0xf0] %vm896, %v895
    %s901 = scalar_lea.vmem [#allocation1], 196
    %s902 = smov 3
    %v903 = vld [vmem:[%s901] ss:$16 sm:%s902]
    %s904 = scalar_lea.vmem [#allocation1], 196
    %s905 = smov 12
    %v906 = vld [vmem:[%s904] ss:$16 sm:%s905]
    %vm907 = vcmask 1043458
    %v908 = vsel %vm907, %v906, %v903
    %909 = vrot.lane.b32.xlu0 %v908, 64
    %v910 = vpop.permute.xlu0 %909
    %vm911 = vcmask 654848
    %s912 = scalar_lea.vmem [#allocation0], 20
    %913 = vst.msk [vmem:[%s912] sm:$0xf] %vm911, %v910
    %s914 = scalar_lea.vmem [#allocation1], 3
    %s915 = smov 3
    %v916 = vld [vmem:[%s914] ss:$16 sm:%s915]
    %s917 = scalar_lea.vmem [#allocation1], 3
    %s918 = smov 12
    %v919 = vld [vmem:[%s917] ss:$16 sm:%s918]
    %vm920 = vcmask 1043458
    %v921 = vsel %vm920, %v919, %v916
    %s922 = scalar_lea.vmem [#allocation1], 3
    %s923 = smov 48
    %v924 = vld [vmem:[%s922] ss:$16 sm:%s923]
    %vm925 = vcmask 1045508
    %v926 = vsel %vm925, %v924, %v921
    %s927 = scalar_lea.vmem [#allocation1], 3
    %s928 = smov 192
    %v929 = vld [vmem:[%s927] ss:$16 sm:%s928]
    %vm930 = vcmask 1047558
    %v931 = vsel %vm930, %v929, %v926
    %932 = vrot.lane.b32.xlu0 %v931, 48
    %v933 = vpop.permute.xlu0 %932
    %vm934 = vcmask 523648
    %935 = vst.msk [vmem:[#allocation0] sm:$0xff] %vm934, %v933
    %s936 = scalar_lea.vmem [#allocation1], 259
    %s937 = smov 3
    %v938 = vld [vmem:[%s936] ss:$16 sm:%s937]
    %s939 = scalar_lea.vmem [#allocation1], 259
    %s940 = smov 12
    %v941 = vld [vmem:[%s939] ss:$16 sm:%s940]
    %vm942 = vcmask 1043458
    %v943 = vsel %vm942, %v941, %v938
    %s944 = scalar_lea.vmem [#allocation1], 67
    %s945 = smov 48
    %v946 = vld [vmem:[%s944] ss:$16 sm:%s945]
    %vm947 = vcmask 1045508
    %v948 = vsel %vm947, %v946, %v943
    %s949 = scalar_lea.vmem [#allocation1], 67
    %s950 = smov 192
    %v951 = vld [vmem:[%s949] ss:$16 sm:%s950]
    %vm952 = vcmask 1047558
    %v953 = vsel %vm952, %v951, %v948
    %954 = vrot.lane.b32.xlu0 %v953, 48
    %v955 = vpop.permute.xlu0 %954
    %vm956 = vcmask 523648
    %s957 = scalar_lea.vmem [#allocation0], 32
    %958 = vst.msk [vmem:[%s957] sm:$0xf] %vm956, %v955
    %s959 = scalar_lea.vmem [#allocation0], 12
    %960 = vst.msk [vmem:[%s959] sm:$0xf0] %vm956, %v955
    %s961 = scalar_lea.vmem [#allocation1], 195
    %s962 = smov 3
    %v963 = vld [vmem:[%s961] ss:$16 sm:%s962]
    %s964 = scalar_lea.vmem [#allocation1], 195
    %s965 = smov 12
    %v966 = vld [vmem:[%s964] ss:$16 sm:%s965]
    %vm967 = vcmask 1043458
    %v968 = vsel %vm967, %v966, %v963
    %969 = vrot.lane.b32.xlu0 %v968, 48
    %v970 = vpop.permute.xlu0 %969
    %vm971 = vcmask 523648
    %s972 = scalar_lea.vmem [#allocation0], 20
    %973 = vst.msk [vmem:[%s972] sm:$0xf] %vm971, %v970
    %s974 = scalar_lea.vmem [#allocation1], 2
    %s975 = smov 3
    %v976 = vld [vmem:[%s974] ss:$16 sm:%s975]
    %s977 = scalar_lea.vmem [#allocation1], 2
    %s978 = smov 12
    %v979 = vld [vmem:[%s977] ss:$16 sm:%s978]
    %vm980 = vcmask 1043458
    %v981 = vsel %vm980, %v979, %v976
    %s982 = scalar_lea.vmem [#allocation1], 2
    %s983 = smov 48
    %v984 = vld [vmem:[%s982] ss:$16 sm:%s983]
    %vm985 = vcmask 1045508
    %v986 = vsel %vm985, %v984, %v981
    %s987 = scalar_lea.vmem [#allocation1], 2
    %s988 = smov 192
    %v989 = vld [vmem:[%s987] ss:$16 sm:%s988]
    %vm990 = vcmask 1047558
    %v991 = vsel %vm990, %v989, %v986
    %992 = vrot.lane.b32.xlu0 %v991, 32
    %v993 = vpop.permute.xlu0 %992
    %vm994 = vcmask 392448
    %995 = vst.msk [vmem:[#allocation0] sm:$0xff] %vm994, %v993
    %s996 = scalar_lea.vmem [#allocation1], 258
    %s997 = smov 3
    %v998 = vld [vmem:[%s996] ss:$16 sm:%s997]
    %s999 = scalar_lea.vmem [#allocation1], 258
    %s1000 = smov 12
    %v1001 = vld [vmem:[%s999] ss:$16 sm:%s1000]
    %vm1002 = vcmask 1043458
    %v1003 = vsel %vm1002, %v1001, %v998
    %s1004 = scalar_lea.vmem [#allocation1], 66
    %s1005 = smov 48
    %v1006 = vld [vmem:[%s1004] ss:$16 sm:%s1005]
    %vm1007 = vcmask 1045508
    %v1008 = vsel %vm1007, %v1006, %v1003
    %s1009 = scalar_lea.vmem [#allocation1], 66
    %s1010 = smov 192
    %v1011 = vld [vmem:[%s1009] ss:$16 sm:%s1010]
    %vm1012 = vcmask 1047558
    %v1013 = vsel %vm1012, %v1011, %v1008
    %1014 = vrot.lane.b32.xlu0 %v1013, 32
    %v1015 = vpop.permute.xlu0 %1014
    %vm1016 = vcmask 392448
    %s1017 = scalar_lea.vmem [#allocation0], 32
    %1018 = vst.msk [vmem:[%s1017] sm:$0xf] %vm1016, %v1015
    %s1019 = scalar_lea.vmem [#allocation0], 12
    %1020 = vst.msk [vmem:[%s1019] sm:$0xf0] %vm1016, %v1015
    %s1021 = scalar_lea.vmem [#allocation1], 194
    %s1022 = smov 3
    %v1023 = vld [vmem:[%s1021] ss:$16 sm:%s1022]
    %s1024 = scalar_lea.vmem [#allocation1], 194
    %s1025 = smov 12
    %v1026 = vld [vmem:[%s1024] ss:$16 sm:%s1025]
    %vm1027 = vcmask 1043458
    %v1028 = vsel %vm1027, %v1026, %v1023
    %1029 = vrot.lane.b32.xlu0 %v1028, 32
    %v1030 = vpop.permute.xlu0 %1029
    %vm1031 = vcmask 392448
    %s1032 = scalar_lea.vmem [#allocation0], 20
    %1033 = vst.msk [vmem:[%s1032] sm:$0xf] %vm1031, %v1030
    %s1034 = scalar_lea.vmem [#allocation1], 1
    %s1035 = smov 3
    %v1036 = vld [vmem:[%s1034] ss:$16 sm:%s1035]
    %s1037 = scalar_lea.vmem [#allocation1], 1
    %s1038 = smov 12
    %v1039 = vld [vmem:[%s1037] ss:$16 sm:%s1038]
    %vm1040 = vcmask 1043458
    %v1041 = vsel %vm1040, %v1039, %v1036
    %s1042 = scalar_lea.vmem [#allocation1], 1
    %s1043 = smov 48
    %v1044 = vld [vmem:[%s1042] ss:$16 sm:%s1043]
    %vm1045 = vcmask 1045508
    %v1046 = vsel %vm1045, %v1044, %v1041
    %s1047 = scalar_lea.vmem [#allocation1], 1
    %s1048 = smov 192
    %v1049 = vld [vmem:[%s1047] ss:$16 sm:%s1048]
    %vm1050 = vcmask 1047558
    %v1051 = vsel %vm1050, %v1049, %v1046
    %1052 = vrot.lane.b32.xlu0 %v1051, 16
    %v1053 = vpop.permute.xlu0 %1052
    %vm1054 = vcmask 261248
    %1055 = vst.msk [vmem:[#allocation0] sm:$0xff] %vm1054, %v1053
    %s1056 = scalar_lea.vmem [#allocation1], 257
    %s1057 = smov 3
    %v1058 = vld [vmem:[%s1056] ss:$16 sm:%s1057]
    %s1059 = scalar_lea.vmem [#allocation1], 257
    %s1060 = smov 12
    %v1061 = vld [vmem:[%s1059] ss:$16 sm:%s1060]
    %vm1062 = vcmask 1043458
    %v1063 = vsel %vm1062, %v1061, %v1058
    %s1064 = scalar_lea.vmem [#allocation1], 4294967241
    %s1065 = smov 48
    %v1066 = vld [vmem:[%s1064] ss:$16 sm:%s1065]
    %vm1067 = vcmask 1045508
    %v1068 = vsel %vm1067, %v1066, %v1063
    %s1069 = scalar_lea.vmem [#allocation1], 4294967241
    %s1070 = smov 192
    %v1071 = vld [vmem:[%s1069] ss:$16 sm:%s1070]
    %vm1072 = vcmask 1047558
    %v1073 = vsel %vm1072, %v1071, %v1068
    %1074 = vrot.lane.b32.xlu0 %v1073, 16
    %v1075 = vpop.permute.xlu0 %1074
    %vm1076 = vcmask 261248
    %s1077 = scalar_lea.vmem [#allocation0], 32
    %1078 = vst.msk [vmem:[%s1077] sm:$0xf] %vm1076, %v1075
    %s1079 = scalar_lea.vmem [#allocation0], 4
    %1080 = vst.msk [vmem:[%s1079] sm:$0xf0] %vm1076, %v1075
    %s1081 = scalar_lea.vmem [#allocation1], 265
    %s1082 = smov 3
    %v1083 = vld [vmem:[%s1081] ss:$16 sm:%s1082]
    %s1084 = scalar_lea.vmem [#allocation1], 265
    %s1085 = smov 12
    %v1086 = vld [vmem:[%s1084] ss:$16 sm:%s1085]
    %vm1087 = vcmask 1043458
    %v1088 = vsel %vm1087, %v1086, %v1083
    %s1089 = scalar_lea.vmem [#allocation1], 9
    %s1090 = smov 48
    %v1091 = vld [vmem:[%s1089] ss:$16 sm:%s1090]
    %vm1092 = vcmask 1045508
    %v1093 = vsel %vm1092, %v1091, %v1088
    %s1094 = scalar_lea.vmem [#allocation1], 9
    %s1095 = smov 192
    %v1096 = vld [vmem:[%s1094] ss:$16 sm:%s1095]
    %vm1097 = vcmask 1047558
    %v1098 = vsel %vm1097, %v1096, %v1093
    %1099 = vrot.lane.b32.xlu0 %v1098, 16
    %v1100 = vpop.permute.xlu0 %1099
    %vm1101 = vcmask 261248
    %s1102 = scalar_lea.vmem [#allocation0], 40
    %1103 = vst.msk [vmem:[%s1102] sm:$0xf] %vm1101, %v1100
    %s1104 = scalar_lea.vmem [#allocation0], 8
    %1105 = vst.msk [vmem:[%s1104] sm:$0xf0] %vm1101, %v1100
    %s1106 = scalar_lea.vmem [#allocation1], 129
    %s1107 = smov 3
    %v1108 = vld [vmem:[%s1106] ss:$16 sm:%s1107]
    %s1109 = scalar_lea.vmem [#allocation1], 129
    %s1110 = smov 12
    %v1111 = vld [vmem:[%s1109] ss:$16 sm:%s1110]
    %vm1112 = vcmask 1043458
    %v1113 = vsel %vm1112, %v1111, %v1108
    %s1114 = scalar_lea.vmem [#allocation1], 129
    %s1115 = smov 48
    %v1116 = vld [vmem:[%s1114] ss:$16 sm:%s1115]
    %vm1117 = vcmask 1045508
    %v1118 = vsel %vm1117, %v1116, %v1113
    %s1119 = scalar_lea.vmem [#allocation1], 129
    %s1120 = smov 192
    %v1121 = vld [vmem:[%s1119] ss:$16 sm:%s1120]
    %vm1122 = vcmask 1047558
    %v1123 = vsel %vm1122, %v1121, %v1118
    %1124 = vrot.lane.b32.xlu0 %v1123, 16
    %v1125 = vpop.permute.xlu0 %1124
    %vm1126 = vcmask 261248
    %s1127 = scalar_lea.vmem [#allocation0], 16
    %1128 = vst.msk [vmem:[%s1127] sm:$0xff] %vm1126, %v1125
    %s1129 = scalar_lea.vmem [#allocation1], 137
    %s1130 = smov 3
    %v1131 = vld [vmem:[%s1129] ss:$16 sm:%s1130]
    %s1132 = scalar_lea.vmem [#allocation1], 137
    %s1133 = smov 12
    %v1134 = vld [vmem:[%s1132] ss:$16 sm:%s1133]
    %vm1135 = vcmask 1043458
    %v1136 = vsel %vm1135, %v1134, %v1131
    %s1137 = scalar_lea.vmem [#allocation1], 137
    %s1138 = smov 48
    %v1139 = vld [vmem:[%s1137] ss:$16 sm:%s1138]
    %vm1140 = vcmask 1045508
    %v1141 = vsel %vm1140, %v1139, %v1136
    %s1142 = scalar_lea.vmem [#allocation1], 137
    %s1143 = smov 192
    %v1144 = vld [vmem:[%s1142] ss:$16 sm:%s1143]
    %vm1145 = vcmask 1047558
    %v1146 = vsel %vm1145, %v1144, %v1141
    %1147 = vrot.lane.b32.xlu0 %v1146, 16
    %v1148 = vpop.permute.xlu0 %1147
    %vm1149 = vcmask 261248
    %s1150 = scalar_lea.vmem [#allocation0], 24
    %1151 = vst.msk [vmem:[%s1150] sm:$0xff] %vm1149, %v1148
    %s1153 = ssub.s32 256, 1
    %v1154 = vld [vmem:[#allocation0] sm:%s1153]
    %v1155 = vpack.c.bf16 0.0, %v1154
    %s1157 = ssub.s32 16, 1
    %1158 = vst [vmem:[%s1] sm:%s1157] %v1155
    %s1159 = scalar_lea.vmem [#allocation0], 8
    %v1160 = vld [vmem:[%s1159] sm:%s1153]
    %v1161 = vpack.c.bf16 0.0, %v1160
    %s1163 = ssub.s32 16, 1
    %s1164 = scalar_lea.vmem %s1, 4
    %1165 = vst [vmem:[%s1164] sm:%s1163] %v1161
    %s1166 = scalar_lea.vmem [#allocation0], 16
    %v1167 = vld [vmem:[%s1166] sm:%s1153]
    %v1168 = vpack.c.bf16 0.0, %v1167
    %s1170 = ssub.s32 16, 1
    %s1171 = scalar_lea.vmem %s1, 8
    %1172 = vst [vmem:[%s1171] sm:%s1170] %v1168
    %s1173 = scalar_lea.vmem [#allocation0], 24
    %v1174 = vld [vmem:[%s1173] sm:%s1153]
    %v1175 = vpack.c.bf16 0.0, %v1174
    %s1177 = ssub.s32 16, 1
    %s1178 = scalar_lea.vmem %s1, 12
    %1179 = vst [vmem:[%s1178] sm:%s1177] %v1175
    %s1180 = scalar_lea.vmem [#allocation0], 32
    %v1181 = vld [vmem:[%s1180] sm:%s1153]
    %v1182 = vpack.c.bf16 0.0, %v1181
    %s1184 = ssub.s32 16, 1
    %s1185 = scalar_lea.vmem %s1, 16
    %1186 = vst [vmem:[%s1185] sm:%s1184] %v1182
    %s1187 = scalar_lea.vmem [#allocation0], 40
    %v1188 = vld [vmem:[%s1187] sm:%s1153]
    %v1189 = vpack.c.bf16 0.0, %v1188
    %s1191 = ssub.s32 16, 1
    %s1192 = scalar_lea.vmem %s1, 20
    %1193 = vst [vmem:[%s1192] sm:%s1191] %v1189

// kernel: decoder_forward.1
$region0: #{decoder_forward.1}
  #allocation0 [shape = 'u32[]', space=smem, size = 0x4, offset = 0x4, fixed_abs, tag = 'smem constant byte address 0x4 - core index']
  #allocation1 [shape = 'u32[72,128]{1,0:T(1,128)}', space=vmem, size = 0x9000, scoped, tag = 'internal scratch']
  %s0 = inlined_call_operand.vmem [shape: bf16[160,20], index: 0, kind: input, shape index: {}]
  %s1 = inlined_call_operand.vmem [shape: bf16[32,160], index: 1, kind: input, shape index: {}]
  %s2 = inlined_call_operand.vmem [shape: bf16[64,32], index: 2, kind: input, shape index: {}]
  %s3 = inlined_call_operand.vmem [shape: bf16[64,32], index: 3, kind: input, shape index: {}]
  %s4 = inlined_call_operand.vmem [shape: bf16[16,32], index: 4, kind: input, shape index: {}]
  %s5 = inlined_call_operand.vmem [shape: f32[32,1], index: 5, kind: input, shape index: {}]
  %s6 = inlined_call_operand.vmem [shape: f32[32,1], index: 6, kind: input, shape index: {}]
  %s7 = inlined_call_operand.vmem [shape: f32[16,1], index: 7, kind: input, shape index: {}]
  %s8 = inlined_call_operand.vmem [shape: f32[16,1], index: 8, kind: input, shape index: {}]
  %s9 = inlined_call_operand.vmem [shape: f32[8,1], index: 9, kind: input, shape index: {}]
  %s10 = inlined_call_operand.vmem [shape: f32[8,1], index: 10, kind: input, shape index: {}]
  %s11 = inlined_call_operand.vmem [shape: bf16[10,32,8], index: 11, kind: input, shape index: {}]
  %s12 = inlined_call_operand.vmem [shape: f32[32,1], index: 12, kind: input, shape index: {}]
  %s13 = inlined_call_operand.vmem [shape: f32[32,2], index: 13, kind: output, shape index: {}]
  %s14 = sld [smem:[#allocation0]]
  $region62: #{decoder_forward.1} parent=0
    _
  %s16 = ssub.s32 1, %s14
  %s17 = scalar_select 0, %s16, %s14
  // Predicated region
  $region2: #{decoder_forward.1} parent=0 // pred_check
    _
  $region3: #{decoder_forward.1} parent=0 // pred_check_branch
    %19 = sbr.rel (0) target = $region5
  $region4: #{decoder_forward.1} parent=0 // pred_region
    _
  $region5: #{decoder_forward.1} parent=0 // pred_fallthru
    _
  // Predicated region
  $region6: #{decoder_forward.1} parent=0 // pred_check
    _
  $region7: #{decoder_forward.1} parent=0 // pred_check_branch
    %21 = sbr.rel (0) target = $region9
  $region8: #{decoder_forward.1} parent=0 // pred_region
    _
  $region9: #{decoder_forward.1} parent=0 // pred_fallthru
    _
  // Predicated region
  $region10: #{decoder_forward.1} parent=0 // pred_check
    _
  $region11: #{decoder_forward.1} parent=0 // pred_check_branch
    %23 = sbr.rel (0) target = $region13
  $region12: #{decoder_forward.1} parent=0 // pred_region
    _
  $region13: #{decoder_forward.1} parent=0 // pred_fallthru
    _
  // Predicated region
  $region14: #{decoder_forward.1} parent=0 // pred_check
    _
  $region15: #{decoder_forward.1} parent=0 // pred_check_branch
    %25 = sbr.rel (0) target = $region17
  $region16: #{decoder_forward.1} parent=0 // pred_region
    _
  $region17: #{decoder_forward.1} parent=0 // pred_fallthru
    _
  // Predicated region
  $region18: #{decoder_forward.1} parent=0 // pred_check
    _
  $region19: #{decoder_forward.1} parent=0 // pred_check_branch
    %27 = sbr.rel (0) target = $region21
  $region20: #{decoder_forward.1} parent=0 // pred_region
    _
  $region21: #{decoder_forward.1} parent=0 // pred_fallthru
    _
  // Predicated region
  $region22: #{decoder_forward.1} parent=0 // pred_check
    _
  $region23: #{decoder_forward.1} parent=0 // pred_check_branch
    %29 = sbr.rel (0) target = $region25
  $region24: #{decoder_forward.1} parent=0 // pred_region
    _
  $region25: #{decoder_forward.1} parent=0 // pred_fallthru
    _
  // Predicated region
  $region26: #{decoder_forward.1} parent=0 // pred_check
    _
  $region27: #{decoder_forward.1} parent=0 // pred_check_branch
    %31 = sbr.rel (0) target = $region29
  $region28: #{decoder_forward.1} parent=0 // pred_region
    _
  $region29: #{decoder_forward.1} parent=0 // pred_fallthru
    _
  // Predicated region
  $region30: #{decoder_forward.1} parent=0 // pred_check
    _
  $region31: #{decoder_forward.1} parent=0 // pred_check_branch
    %33 = sbr.rel (0) target = $region33
  $region32: #{decoder_forward.1} parent=0 // pred_region
    _
  $region33: #{decoder_forward.1} parent=0 // pred_fallthru
    _
  // Predicated region
  $region34: #{decoder_forward.1} parent=0 // pred_check
    _
  $region35: #{decoder_forward.1} parent=0 // pred_check_branch
    %35 = sbr.rel (0) target = $region37
  $region36: #{decoder_forward.1} parent=0 // pred_region
    _
  $region37: #{decoder_forward.1} parent=0 // pred_fallthru
    _
  // Predicated region
  $region38: #{decoder_forward.1} parent=0 // pred_check
    _
  $region39: #{decoder_forward.1} parent=0 // pred_check_branch
    %37 = sbr.rel (0) target = $region41
  $region40: #{decoder_forward.1} parent=0 // pred_region
    _
  $region41: #{decoder_forward.1} parent=0 // pred_fallthru
    _
  // Predicated region
  $region42: #{decoder_forward.1} parent=0 // pred_check
    _
  $region43: #{decoder_forward.1} parent=0 // pred_check_branch
    %39 = sbr.rel (0) target = $region45
  $region44: #{decoder_forward.1} parent=0 // pred_region
    _
  $region45: #{decoder_forward.1} parent=0 // pred_fallthru
    _
  // Predicated region
  $region46: #{decoder_forward.1} parent=0 // pred_check
    _
  $region47: #{decoder_forward.1} parent=0 // pred_check_branch
    %41 = sbr.rel (0) target = $region49
  $region48: #{decoder_forward.1} parent=0 // pred_region
    _
  $region49: #{decoder_forward.1} parent=0 // pred_fallthru
    _
  // Predicated region
  $region50: #{decoder_forward.1} parent=0 // pred_check
    _
  $region51: #{decoder_forward.1} parent=0 // pred_check_branch
    %43 = sbr.rel (0) target = $region53
  $region52: #{decoder_forward.1} parent=0 // pred_region
    _
  $region53: #{decoder_forward.1} parent=0 // pred_fallthru
    _
  %v45 = vld [vmem:[%s1] sm:$0xff]
  %v46 = vld [vmem:[%s1 + $0x8] sm:$0xff]
  %v47 = vld [vmem:[%s1 + $0x10] sm:$0xff]
  %v48 = vld [vmem:[%s1 + $0x18] sm:$0xff]
  %v49 = vld [vmem:[%s0] sm:$0xf]
  %v50 = vld [vmem:[%s0 + $0x4] sm:$0xf]
  %v51 = vld [vmem:[%s0 + $0x8] sm:$0xf]
  %v52 = vld [vmem:[%s0 + $0xc] sm:$0xf]
  %v53 = vld [vmem:[%s0 + $0x10] sm:$0xf]
  %v54 = vld [vmem:[%s0 + $0x14] sm:$0xf]
  %v55 = vld [vmem:[%s0 + $0x18] sm:$0xf]
  %v56 = vld [vmem:[%s0 + $0x1c] sm:$0xf]
  %v57 = vld [vmem:[%s0 + $0x20] sm:$0xf]
  %v58 = vld [vmem:[%s0 + $0x24] sm:$0xf]
  %v59 = vld [vmem:[%s0 + $0x28] sm:$0xf]
  %v60 = vld [vmem:[%s0 + $0x2c] sm:$0xf]
  %v61 = vld [vmem:[%s0 + $0x30] sm:$0xf]
  %v62 = vld [vmem:[%s0 + $0x34] sm:$0xf]
  %v63 = vld [vmem:[%s0 + $0x38] sm:$0xf]
  %v64 = vld [vmem:[%s0 + $0x3c] sm:$0xf]
  %v65 = vld [vmem:[%s0 + $0x40] sm:$0xf]
  %v66 = vld [vmem:[%s0 + $0x44] sm:$0xf]
  %v67 = vld [vmem:[%s0 + $0x48] sm:$0xf]
  %v68 = vld [vmem:[%s0 + $0x4c] sm:$0xf]
  %v73 = vunpack.c.l.b16 %v45
  %v74 = vunpack.c.h.b16 %v45
  %v75 = vunpack.c.l.b16 %v46
  %v76 = vunpack.c.h.b16 %v46
  %v77 = vunpack.c.l.b16 %v47
  %v78 = vunpack.c.h.b16 %v47
  %v79 = vunpack.c.l.b16 %v48
  %v80 = vunpack.c.h.b16 %v48
  %v81 = vpack.c.b16 %v75, %v73
  %v82 = vpack.c.b16 %v76, %v74
  %v83 = vpack.c.b16 %v79, %v77
  %v84 = vpack.c.b16 %v80, %v78
  %v107 = vunpack.c.l.b16 %v49
  %v108 = vunpack.c.l.b16 %v50
  %v109 = vunpack.c.l.b16 %v51
  %v110 = vunpack.c.l.b16 %v52
  %v111 = vunpack.c.l.b16 %v53
  %v112 = vunpack.c.l.b16 %v54
  %v113 = vunpack.c.l.b16 %v55
  %v114 = vunpack.c.l.b16 %v56
  %v115 = vunpack.c.l.b16 %v57
  %v116 = vunpack.c.l.b16 %v58
  %v117 = vunpack.c.l.b16 %v59
  %v118 = vunpack.c.l.b16 %v60
  %v119 = vunpack.c.l.b16 %v61
  %v120 = vunpack.c.l.b16 %v62
  %v121 = vunpack.c.l.b16 %v63
  %v122 = vunpack.c.l.b16 %v64
  %v123 = vunpack.c.l.b16 %v65
  %v124 = vunpack.c.l.b16 %v66
  %v125 = vunpack.c.l.b16 %v67
  %v126 = vunpack.c.l.b16 %v68
  %v127 = vpack.c.b16 %v108, %v107
  %v128 = vpack.c.b16 %v110, %v109
  %v129 = vpack.c.b16 %v112, %v111
  %v130 = vpack.c.b16 %v114, %v113
  %v131 = vpack.c.b16 %v116, %v115
  %v132 = vpack.c.b16 %v118, %v117
  %v133 = vpack.c.b16 %v120, %v119
  %v134 = vpack.c.b16 %v122, %v121
  %v135 = vpack.c.b16 %v124, %v123
  %v136 = vpack.c.b16 %v126, %v125
  %vm147 = vcmask 261120
  %v149 = vsel %vm147, %v82, 0
  %v152 = vsel %vm147, %v84, 0
  %154 = vmatpush.bf16.msra.mxu0 %v134
  %155 = vmatpush.bf16.msra.mxu0 %v133
  %156 = vmatpush.bf16.msra.mxu0 %v132
  %157 = vmatpush.bf16.msra.mxu0 %v131
  %158 = vmatpush.bf16.msra.mxu0 %v130
  %159 = vmatpush.bf16.msra.mxu0 %v129
  %160 = vmatpush.bf16.msra.mxu0 %v128
  %161 = vmatpush.bf16.msra.mxu0 %v127
  %162 = vmatmul.bf16.gmra.mxu0 %v81
  %v163 = vpop.f32.mrf.mxu0
  %v164 = vadd.f32 0.0, %v163
  %v165 = vpop.f32.mrf.mxu0
  %v166 = vadd.f32 0.0, %v165
  %167 = vmatmul.bf16.gmra.mxu0 %v83
  %v168 = vpop.f32.mrf.mxu0
  %v169 = vadd.f32 0.0, %v168
  %v170 = vpop.f32.mrf.mxu0
  %v171 = vadd.f32 0.0, %v170
  %172 = vdwg.mxu0
  %173 = vmatpush.bf16.msra.mxu0 0
  %174 = vmatpush.bf16.msra.mxu0 0
  %175 = vmatpush.bf16.msra.mxu0 0
  %176 = vmatpush.bf16.msra.mxu0 0
  %177 = vmatpush.bf16.msra.mxu0 0
  %178 = vmatpush.bf16.msra.mxu0 0
  %179 = vmatpush.bf16.msra.mxu0 %v136
  %180 = vmatpush.bf16.msra.mxu0 %v135
  %181 = vmatmul.bf16.gmra.mxu0 %v149
  %v182 = vpop.f32.mrf.mxu0
  %v183 = vadd.f32 %v164, %v182
  %v184 = vpop.f32.mrf.mxu0
  %v185 = vadd.f32 %v166, %v184
  %186 = vmatmul.bf16.gmra.mxu0 %v152
  %v187 = vpop.f32.mrf.mxu0
  %v188 = vadd.f32 %v169, %v187
  %v189 = vpop.f32.mrf.mxu0
  %v190 = vadd.f32 %v171, %v189
  %191 = vdwg.mxu0
  %vm192 = vcmask 162816
  %v193 = vsel %vm192, %v183, 0.0
  %194 = vadd.xlane.f32.xlu0 %v193
  %v195 = vpop.xlane.xlu0 %194
  %v196 = vsel %vm192, %v185, 0.0
  %197 = vadd.xlane.f32.xlu0 %v196
  %v198 = vpop.xlane.xlu0 %197
  %v199 = vsel %vm192, %v188, 0.0
  %200 = vadd.xlane.f32.xlu0 %v199
  %v201 = vpop.xlane.xlu0 %200
  %v202 = vsel %vm192, %v190, 0.0
  %203 = vadd.xlane.f32.xlu0 %v202
  %v204 = vpop.xlane.xlu0 %203
  %v205 = vmul.f32 %v183, %v183
  %v206 = vmul.f32 %v185, %v185
  %v207 = vmul.f32 %v188, %v188
  %v208 = vmul.f32 %v190, %v190
  %v209 = vsel %vm192, %v205, 0.0
  %210 = vadd.xlane.f32.xlu0 %v209
  %v211 = vpop.xlane.xlu0 %210
  %v212 = vsel %vm192, %v206, 0.0
  %213 = vadd.xlane.f32.xlu0 %v212
  %v214 = vpop.xlane.xlu0 %213
  %v215 = vsel %vm192, %v207, 0.0
  %216 = vadd.xlane.f32.xlu0 %v215
  %v217 = vpop.xlane.xlu0 %216
  %v218 = vsel %vm192, %v208, 0.0
  %219 = vadd.xlane.f32.xlu0 %v218
  %v220 = vpop.xlane.xlu0 %219
  %v221 = vrcp.pop 20.0
  %v222 = vmul.f32 20.0, %v221
  %v223 = vsub.f32 1.0, %v222
  %v224 = vmul.f32 %v221, %v223
  %v225 = vadd.f32 %v221, %v224
  %vm226 = vweird.f32 %v221
  %v227 = vsel %vm226, %v221, %v225
  %v228 = vmul.f32 %v195, %v227
  %v229 = vmul.f32 %v198, %v227
  %v230 = vmul.f32 %v201, %v227
  %v231 = vmul.f32 %v204, %v227
  %v232 = vmul.f32 %v211, %v227
  %v233 = vmul.f32 %v214, %v227
  %v234 = vmul.f32 %v217, %v227
  %v235 = vmul.f32 %v220, %v227
  %v236 = vmul.f32 %v228, %v228
  %v237 = vmul.f32 %v229, %v229
  %v238 = vmul.f32 %v230, %v230
  %v239 = vmul.f32 %v231, %v231
  %v240 = vsub.f32 %v232, %v236
  %v241 = vsub.f32 %v233, %v237
  %v242 = vsub.f32 %v234, %v238
  %v243 = vsub.f32 %v235, %v239
  %v244 = vmax.f32 %v240, 0.0
  %v245 = vmax.f32 %v241, 0.0
  %v246 = vmax.f32 %v242, 0.0
  %v247 = vmax.f32 %v243, 0.0
  %v248 = vld [vmem:[%s5] sm:$0xff]
  %v249 = vld [vmem:[%s5 + $0x8] sm:$0xff]
  %v250 = vld [vmem:[%s5 + $0x10] sm:$0xff]
  %v251 = vld [vmem:[%s5 + $0x18] sm:$0xff]
  %v252 = vadd.f32 %v244, 1e-05
  %v253 = vadd.f32 %v245, 1e-05
  %v254 = vadd.f32 %v246, 1e-05
  %v255 = vadd.f32 %v247, 1e-05
  %v256 = vrsqrt.pop %v252
  %v257 = vmul.f32 %v256, %v252
  %v258 = vmul.f32 %v257, %v256
  %v259 = vmul.f32 0.5, %v258
  %v260 = vsub.f32 1.5, %v259
  %v261 = vmul.f32 %v256, %v260
  %vm262 = vweird.f32 %v252
  %vm263 = vweird.f32 %v256
  %vm264 = vmor %vm262, %vm263
  %v265 = vsel %vm264, %v256, %v261
  %v266 = vrsqrt.pop %v253
  %v267 = vmul.f32 %v266, %v253
  %v268 = vmul.f32 %v267, %v266
  %v269 = vmul.f32 0.5, %v268
  %v270 = vsub.f32 1.5, %v269
  %v271 = vmul.f32 %v266, %v270
  %vm272 = vweird.f32 %v253
  %vm273 = vweird.f32 %v266
  %vm274 = vmor %vm272, %vm273
  %v275 = vsel %vm274, %v266, %v271
  %v276 = vrsqrt.pop %v254
  %v277 = vmul.f32 %v276, %v254
  %v278 = vmul.f32 %v277, %v276
  %v279 = vmul.f32 0.5, %v278
  %v280 = vsub.f32 1.5, %v279
  %v281 = vmul.f32 %v276, %v280
  %vm282 = vweird.f32 %v254
  %vm283 = vweird.f32 %v276
  %vm284 = vmor %vm282, %vm283
  %v285 = vsel %vm284, %v276, %v281
  %v286 = vrsqrt.pop %v255
  %v287 = vmul.f32 %v286, %v255
  %v288 = vmul.f32 %v287, %v286
  %v289 = vmul.f32 0.5, %v288
  %v290 = vsub.f32 1.5, %v289
  %v291 = vmul.f32 %v286, %v290
  %vm292 = vweird.f32 %v255
  %vm293 = vweird.f32 %v286
  %vm294 = vmor %vm292, %vm293
  %v295 = vsel %vm294, %v286, %v291
  %v296 = vmul.f32 %v248, %v265
  %v297 = vmul.f32 %v249, %v275
  %v298 = vmul.f32 %v250, %v285
  %v299 = vmul.f32 %v251, %v295
  %v300 = vld [vmem:[%s6] sm:$0xff]
  %v301 = vld [vmem:[%s6 + $0x8] sm:$0xff]
  %v302 = vld [vmem:[%s6 + $0x10] sm:$0xff]
  %v303 = vld [vmem:[%s6 + $0x18] sm:$0xff]
  %v304 = vmul.f32 %v228, %v296
  %v305 = vmul.f32 %v229, %v297
  %v306 = vmul.f32 %v230, %v298
  %v307 = vmul.f32 %v231, %v299
  %v308 = vsub.f32 %v300, %v304
  %v309 = vsub.f32 %v301, %v305
  %v310 = vsub.f32 %v302, %v306
  %v311 = vsub.f32 %v303, %v307
  %313 = vset.pattern.permute.xlu0 0
  %314 = vperm.xlu0 %313, %v296
  %v315 = vpop.permute.xlu0 %314
  %318 = vset.pattern.permute.xlu0 0
  %319 = vperm.xlu0 %318, %v297
  %v320 = vpop.permute.xlu0 %319
  %323 = vset.pattern.permute.xlu0 0
  %324 = vperm.xlu0 %323, %v298
  %v325 = vpop.permute.xlu0 %324
  %328 = vset.pattern.permute.xlu0 0
  %329 = vperm.xlu0 %328, %v299
  %v330 = vpop.permute.xlu0 %329
  %v332 = vmul.f32 %v183, %v315
  %v333 = vmul.f32 %v185, %v320
  %v334 = vmul.f32 %v188, %v325
  %v335 = vmul.f32 %v190, %v330
  %337 = vset.pattern.permute.xlu0 0
  %338 = vperm.xlu0 %337, %v308
  %v339 = vpop.permute.xlu0 %338
  %342 = vset.pattern.permute.xlu0 0
  %343 = vperm.xlu0 %342, %v309
  %v344 = vpop.permute.xlu0 %343
  %347 = vset.pattern.permute.xlu0 0
  %348 = vperm.xlu0 %347, %v310
  %v349 = vpop.permute.xlu0 %348
  %352 = vset.pattern.permute.xlu0 0
  %353 = vperm.xlu0 %352, %v311
  %v354 = vpop.permute.xlu0 %353
  %v356 = vadd.f32 %v332, %v339
  %v357 = vadd.f32 %v333, %v344
  %v358 = vadd.f32 %v334, %v349
  %v359 = vadd.f32 %v335, %v354
  %v360 = vmax.f32 %v356, 0.0
  %v361 = vmax.f32 %v357, 0.0
  %v362 = vmax.f32 %v358, 0.0
  %v363 = vmax.f32 %v359, 0.0
  %v364 = vld [vmem:[%s2] sm:$0xf]
  %v365 = vld [vmem:[%s2 + $0x4] sm:$0xf]
  %v366 = vld [vmem:[%s2 + $0x8] sm:$0xf]
  %v367 = vld [vmem:[%s2 + $0xc] sm:$0xf]
  %v368 = vld [vmem:[%s2 + $0x10] sm:$0xf]
  %v369 = vld [vmem:[%s2 + $0x14] sm:$0xf]
  %v370 = vld [vmem:[%s2 + $0x18] sm:$0xf]
  %v371 = vld [vmem:[%s2 + $0x1c] sm:$0xf]
  %v372 = vpack.c.bf16 %v361, %v360
  %v373 = vpack.c.bf16 %v363, %v362
  %v382 = vunpack.c.l.b16 %v364
  %v383 = vunpack.c.l.b16 %v365
  %v384 = vunpack.c.l.b16 %v366
  %v385 = vunpack.c.l.b16 %v367
  %v386 = vunpack.c.l.b16 %v368
  %v387 = vunpack.c.l.b16 %v369
  %v388 = vunpack.c.l.b16 %v370
  %v389 = vunpack.c.l.b16 %v371
  %v390 = vpack.c.b16 %v383, %v382
  %v391 = vpack.c.b16 %v385, %v384
  %v392 = vpack.c.b16 %v387, %v386
  %v393 = vpack.c.b16 %v389, %v388
  %v395 = vsel %vm147, %v390, 0
  %v398 = vsel %vm147, %v391, 0
  %v401 = vsel %vm147, %v392, 0
  %v404 = vsel %vm147, %v393, 0
  %406 = vmatpush.bf16.msra.mxu0 0
  %407 = vmatpush.bf16.msra.mxu0 0
  %408 = vmatpush.bf16.msra.mxu0 0
  %409 = vmatpush.bf16.msra.mxu0 0
  %410 = vmatpush.bf16.msra.mxu0 0
  %411 = vmatpush.bf16.msra.mxu0 0
  %412 = vmatpush.bf16.msra.mxu0 %v373
  %413 = vmatpush.bf16.msra.mxu0 %v372
  %414 = vmatmul.bf16.gmra.mxu0 %v395
  %v415 = vpop.f32.mrf.mxu0
  %v416 = vadd.f32 0.0, %v415
  %v417 = vpop.f32.mrf.mxu0
  %v418 = vadd.f32 0.0, %v417
  %419 = vmatmul.bf16.gmra.mxu0 %v398
  %v420 = vpop.f32.mrf.mxu0
  %v421 = vadd.f32 0.0, %v420
  %v422 = vpop.f32.mrf.mxu0
  %v423 = vadd.f32 0.0, %v422
  %424 = vmatmul.bf16.gmra.mxu0 %v401
  %v425 = vpop.f32.mrf.mxu0
  %v426 = vadd.f32 0.0, %v425
  %v427 = vpop.f32.mrf.mxu0
  %v428 = vadd.f32 0.0, %v427
  %429 = vmatmul.bf16.gmra.mxu0 %v404
  %v430 = vpop.f32.mrf.mxu0
  %v431 = vadd.f32 0.0, %v430
  %v432 = vpop.f32.mrf.mxu0
  %v433 = vadd.f32 0.0, %v432
  %434 = vdwg.mxu0
  %437 = vrot.lane.b32.xlu0 %v431, 2
  %v438 = vpop.permute.xlu0 %437
  %439 = vrot.lane.b32.xlu0 %v433, 2
  %v440 = vpop.permute.xlu0 %439
  %vm443 = vcmask 15360
  %v444 = vsel %vm443, 0.0, %v438
  %v445 = vsel %vm443, 0.0, %v440
  %448 = vrot.lane.b32.xlu0 %v416, 126
  %v449 = vpop.permute.xlu0 %448
  %450 = vrot.lane.b32.xlu0 %v418, 126
  %v451 = vpop.permute.xlu0 %450
  %vm454 = vcmask 146432
  %v455 = vsel %vm454, %v449, 0.0
  %v456 = vsel %vm454, %v451, 0.0
  %v457 = vadd.f32 %v421, %v444
  %v458 = vadd.f32 %v423, %v445
  %v459 = vadd.f32 %v426, %v455
  %v460 = vadd.f32 %v428, %v456
  %v461 = vsel %vm192, %v457, 0.0
  %462 = vadd.xlane.f32.xlu0 %v461
  %v463 = vpop.xlane.xlu0 %462
  %v464 = vsel %vm192, %v458, 0.0
  %465 = vadd.xlane.f32.xlu0 %v464
  %v466 = vpop.xlane.xlu0 %465
  %v467 = vsel %vm192, %v459, 0.0
  %468 = vadd.xlane.f32.xlu0 %v467
  %v469 = vpop.xlane.xlu0 %468
  %v470 = vsel %vm192, %v460, 0.0
  %471 = vadd.xlane.f32.xlu0 %v470
  %v472 = vpop.xlane.xlu0 %471
  %v473 = vmul.f32 %v457, %v457
  %v474 = vmul.f32 %v458, %v458
  %v475 = vmul.f32 %v459, %v459
  %v476 = vmul.f32 %v460, %v460
  %v477 = vsel %vm192, %v473, 0.0
  %478 = vadd.xlane.f32.xlu0 %v477
  %v479 = vpop.xlane.xlu0 %478
  %v480 = vsel %vm192, %v474, 0.0
  %481 = vadd.xlane.f32.xlu0 %v480
  %v482 = vpop.xlane.xlu0 %481
  %v483 = vsel %vm192, %v475, 0.0
  %484 = vadd.xlane.f32.xlu0 %v483
  %v485 = vpop.xlane.xlu0 %484
  %v486 = vsel %vm192, %v476, 0.0
  %487 = vadd.xlane.f32.xlu0 %v486
  %v488 = vpop.xlane.xlu0 %487
  %v489 = vadd.f32 %v463, %v469
  %v490 = vadd.f32 %v466, %v472
  %v491 = vadd.f32 %v479, %v485
  %v492 = vadd.f32 %v482, %v488
  %v493 = vrcp.pop 40.0
  %v494 = vmul.f32 40.0, %v493
  %v495 = vsub.f32 1.0, %v494
  %v496 = vmul.f32 %v493, %v495
  %v497 = vadd.f32 %v493, %v496
  %vm498 = vweird.f32 %v493
  %v499 = vsel %vm498, %v493, %v497
  %v500 = vmul.f32 %v489, %v499
  %v501 = vmul.f32 %v490, %v499
  %v502 = vmul.f32 %v491, %v499
  %v503 = vmul.f32 %v492, %v499
  %v504 = vmul.f32 %v500, %v500
  %v505 = vmul.f32 %v501, %v501
  %v506 = vsub.f32 %v502, %v504
  %v507 = vsub.f32 %v503, %v505
  %v508 = vmax.f32 %v506, 0.0
  %v509 = vmax.f32 %v507, 0.0
  %v510 = vld [vmem:[%s7] sm:$0xff]
  %v511 = vld [vmem:[%s7 + $0x8] sm:$0xff]
  %v512 = vadd.f32 %v508, 1e-05
  %v513 = vadd.f32 %v509, 1e-05
  %v514 = vrsqrt.pop %v512
  %v515 = vmul.f32 %v514, %v512
  %v516 = vmul.f32 %v515, %v514
  %v517 = vmul.f32 0.5, %v516
  %v518 = vsub.f32 1.5, %v517
  %v519 = vmul.f32 %v514, %v518
  %vm520 = vweird.f32 %v512
  %vm521 = vweird.f32 %v514
  %vm522 = vmor %vm520, %vm521
  %v523 = vsel %vm522, %v514, %v519
  %v524 = vrsqrt.pop %v513
  %v525 = vmul.f32 %v524, %v513
  %v526 = vmul.f32 %v525, %v524
  %v527 = vmul.f32 0.5, %v526
  %v528 = vsub.f32 1.5, %v527
  %v529 = vmul.f32 %v524, %v528
  %vm530 = vweird.f32 %v513
  %vm531 = vweird.f32 %v524
  %vm532 = vmor %vm530, %vm531
  %v533 = vsel %vm532, %v524, %v529
  %v534 = vmul.f32 %v510, %v523
  %v535 = vmul.f32 %v511, %v533
  %v536 = vld [vmem:[%s8] sm:$0xff]
  %v537 = vld [vmem:[%s8 + $0x8] sm:$0xff]
  %v538 = vmul.f32 %v500, %v534
  %v539 = vmul.f32 %v501, %v535
  %v540 = vsub.f32 %v536, %v538
  %v541 = vsub.f32 %v537, %v539
  %543 = vset.pattern.permute.xlu0 0
  %544 = vperm.xlu0 %543, %v534
  %v545 = vpop.permute.xlu0 %544
  %548 = vset.pattern.permute.xlu0 0
  %549 = vperm.xlu0 %548, %v535
  %v550 = vpop.permute.xlu0 %549
  %v552 = vmul.f32 %v457, %v545
  %v553 = vmul.f32 %v458, %v550
  %v554 = vmul.f32 %v459, %v545
  %v555 = vmul.f32 %v460, %v550
  %557 = vset.pattern.permute.xlu0 0
  %558 = vperm.xlu0 %557, %v540
  %v559 = vpop.permute.xlu0 %558
  %562 = vset.pattern.permute.xlu0 0
  %563 = vperm.xlu0 %562, %v541
  %v564 = vpop.permute.xlu0 %563
  %v566 = vadd.f32 %v552, %v559
  %v567 = vadd.f32 %v553, %v564
  %v568 = vadd.f32 %v554, %v559
  %v569 = vadd.f32 %v555, %v564
  %v570 = vmax.f32 %v566, 0.0
  %v571 = vmax.f32 %v567, 0.0
  %v572 = vmax.f32 %v568, 0.0
  %v573 = vmax.f32 %v569, 0.0
  %v574 = vld [vmem:[%s3] sm:$0xf]
  %v575 = vld [vmem:[%s3 + $0x4] sm:$0xf]
  %v576 = vld [vmem:[%s3 + $0x8] sm:$0xf]
  %v577 = vld [vmem:[%s3 + $0xc] sm:$0xf]
  %v578 = vld [vmem:[%s3 + $0x10] sm:$0xf]
  %v579 = vld [vmem:[%s3 + $0x14] sm:$0xf]
  %v580 = vld [vmem:[%s3 + $0x18] sm:$0xf]
  %v581 = vld [vmem:[%s3 + $0x1c] sm:$0xf]
  %v582 = vpack.c.bf16 %v571, %v570
  %v583 = vpack.c.bf16 %v573, %v572
  %v592 = vunpack.c.l.b16 %v574
  %v593 = vunpack.c.l.b16 %v575
  %v594 = vunpack.c.l.b16 %v576
  %v595 = vunpack.c.l.b16 %v577
  %v596 = vunpack.c.l.b16 %v578
  %v597 = vunpack.c.l.b16 %v579
  %v598 = vunpack.c.l.b16 %v580
  %v599 = vunpack.c.l.b16 %v581
  %v600 = vpack.c.b16 %v593, %v592
  %v601 = vpack.c.b16 %v595, %v594
  %v602 = vpack.c.b16 %v597, %v596
  %v603 = vpack.c.b16 %v599, %v598
  %v605 = vsel %vm147, %v600, 0
  %v608 = vsel %vm147, %v601, 0
  %v611 = vsel %vm147, %v602, 0
  %v614 = vsel %vm147, %v603, 0
  %616 = vmatpush.bf16.msra.mxu0 0
  %617 = vmatpush.bf16.msra.mxu0 0
  %618 = vmatpush.bf16.msra.mxu0 0
  %619 = vmatpush.bf16.msra.mxu0 0
  %620 = vmatpush.bf16.msra.mxu0 0
  %621 = vmatpush.bf16.msra.mxu0 0
  %622 = vmatpush.bf16.msra.mxu0 %v583
  %623 = vmatpush.bf16.msra.mxu0 %v582
  %624 = vmatmul.bf16.gmra.mxu0 %v605
  %v625 = vpop.f32.mrf.mxu0
  %v626 = vadd.f32 0.0, %v625
  %v627 = vpop.f32.mrf.mxu0
  %v628 = vadd.f32 0.0, %v627
  %629 = vmatmul.bf16.gmra.mxu0 %v608
  %v630 = vpop.f32.mrf.mxu0
  %v631 = vadd.f32 0.0, %v630
  %v632 = vpop.f32.mrf.mxu0
  %v633 = vadd.f32 0.0, %v632
  %634 = vmatmul.bf16.gmra.mxu0 %v611
  %v635 = vpop.f32.mrf.mxu0
  %v636 = vadd.f32 0.0, %v635
  %v637 = vpop.f32.mrf.mxu0
  %v638 = vadd.f32 0.0, %v637
  %639 = vmatmul.bf16.gmra.mxu0 %v614
  %v640 = vpop.f32.mrf.mxu0
  %v641 = vadd.f32 0.0, %v640
  %v642 = vpop.f32.mrf.mxu0
  %v643 = vadd.f32 0.0, %v642
  %644 = vdwg.mxu0
  %646 = vrot.lane.b32.xlu0 %v643, 2
  %v647 = vpop.permute.xlu0 %646
  %v649 = vsel %vm443, 0.0, %v647
  %v650 = vadd.f32 %v628, %v649
  %v651 = vadd.f32 %v631, %v636
  %653 = vrot.lane.b32.xlu0 %v626, 126
  %v654 = vpop.permute.xlu0 %653
  %v656 = vsel %vm454, %v654, 0.0
  %v657 = vadd.f32 %v638, %v633
  %v658 = vadd.f32 %v641, %v656
  %v659 = vsel %vm192, %v650, 0.0
  %660 = vadd.xlane.f32.xlu0 %v659
  %v661 = vpop.xlane.xlu0 %660
  %v662 = vsel %vm192, %v651, 0.0
  %663 = vadd.xlane.f32.xlu0 %v662
  %v664 = vpop.xlane.xlu0 %663
  %v665 = vsel %vm192, %v657, 0.0
  %666 = vadd.xlane.f32.xlu0 %v665
  %v667 = vpop.xlane.xlu0 %666
  %v668 = vsel %vm192, %v658, 0.0
  %669 = vadd.xlane.f32.xlu0 %v668
  %v670 = vpop.xlane.xlu0 %669
  %v671 = vmul.f32 %v650, %v650
  %v672 = vmul.f32 %v651, %v651
  %v673 = vmul.f32 %v657, %v657
  %v674 = vmul.f32 %v658, %v658
  %v675 = vsel %vm192, %v671, 0.0
  %676 = vadd.xlane.f32.xlu0 %v675
  %v677 = vpop.xlane.xlu0 %676
  %v678 = vsel %vm192, %v672, 0.0
  %679 = vadd.xlane.f32.xlu0 %v678
  %v680 = vpop.xlane.xlu0 %679
  %v681 = vsel %vm192, %v673, 0.0
  %682 = vadd.xlane.f32.xlu0 %v681
  %v683 = vpop.xlane.xlu0 %682
  %v684 = vsel %vm192, %v674, 0.0
  %685 = vadd.xlane.f32.xlu0 %v684
  %v686 = vpop.xlane.xlu0 %685
  %v687 = vadd.f32 %v661, %v664
  %v688 = vadd.f32 %v677, %v680
  %v689 = vadd.f32 %v687, %v667
  %v690 = vadd.f32 %v688, %v683
  %v691 = vadd.f32 %v689, %v670
  %v692 = vadd.f32 %v690, %v686
  %v693 = vrcp.pop 80.0
  %v694 = vmul.f32 80.0, %v693
  %v695 = vsub.f32 1.0, %v694
  %v696 = vmul.f32 %v693, %v695
  %v697 = vadd.f32 %v693, %v696
  %vm698 = vweird.f32 %v693
  %v699 = vsel %vm698, %v693, %v697
  %v700 = vmul.f32 %v691, %v699
  %v701 = vmul.f32 %v692, %v699
  %v702 = vmul.f32 %v700, %v700
  %v703 = vsub.f32 %v701, %v702
  %v704 = vmax.f32 %v703, 0.0
  %v705 = vld [vmem:[%s9] sm:$0xff]
  %v706 = vadd.f32 %v704, 1e-05
  %v707 = vrsqrt.pop %v706
  %v708 = vmul.f32 %v707, %v706
  %v709 = vmul.f32 %v708, %v707
  %v710 = vmul.f32 0.5, %v709
  %v711 = vsub.f32 1.5, %v710
  %v712 = vmul.f32 %v707, %v711
  %vm713 = vweird.f32 %v706
  %vm714 = vweird.f32 %v707
  %vm715 = vmor %vm713, %vm714
  %v716 = vsel %vm715, %v707, %v712
  %v717 = vmul.f32 %v705, %v716
  %v718 = vld [vmem:[%s10] sm:$0xff]
  %v719 = vmul.f32 %v700, %v717
  %v720 = vsub.f32 %v718, %v719
  %722 = vset.pattern.permute.xlu0 0
  %723 = vperm.xlu0 %722, %v717
  %v724 = vpop.permute.xlu0 %723
  %v726 = vmul.f32 %v650, %v724
  %v727 = vmul.f32 %v651, %v724
  %v728 = vmul.f32 %v657, %v724
  %v729 = vmul.f32 %v658, %v724
  %731 = vset.pattern.permute.xlu0 0
  %732 = vperm.xlu0 %731, %v720
  %v733 = vpop.permute.xlu0 %732
  %v735 = vadd.f32 %v726, %v733
  %v736 = vadd.f32 %v727, %v733
  %v737 = vadd.f32 %v728, %v733
  %v738 = vadd.f32 %v729, %v733
  %v739 = vmax.f32 %v735, 0.0
  %v740 = vmax.f32 %v736, 0.0
  %v741 = vmax.f32 %v737, 0.0
  %v742 = vmax.f32 %v738, 0.0
  %v743 = vld [vmem:[%s4] sm:$0xf]
  %v744 = vld [vmem:[%s4 + $0x4] sm:$0xf]
  %v745 = vpack.c.bf16 %v740, %v739
  %v746 = vpack.c.bf16 %v742, %v741
  %v749 = vunpack.c.l.b16 %v743
  %v750 = vunpack.c.l.b16 %v744
  %v751 = vpack.c.b16 %v750, %v749
  %v753 = vsel %vm147, %v751, 0
  %755 = vmatpush.bf16.msra.mxu0 0
  %756 = vmatpush.bf16.msra.mxu0 0
  %757 = vmatpush.bf16.msra.mxu0 0
  %758 = vmatpush.bf16.msra.mxu0 0
  %759 = vmatpush.bf16.msra.mxu0 0
  %760 = vmatpush.bf16.msra.mxu0 0
  %761 = vmatpush.bf16.msra.mxu0 %v746
  %762 = vmatpush.bf16.msra.mxu0 %v745
  %763 = vmatmul.bf16.gmra.mxu0 %v753
  %v764 = vpop.f32.mrf.mxu0
  %v765 = vadd.f32 0.0, %v764
  %v766 = vpop.f32.mrf.mxu0
  %v767 = vadd.f32 0.0, %v766
  %768 = vdwg.mxu0
  %v770 = vrot.slane %v767, 7
  %771 = vrot.lane.b32.xlu0 %v770, 2
  %v772 = vpop.permute.xlu0 %771
  %v774 = vsel %vm443, 0.0, %v772
  %v776 = vrot.slane %v774, 7
  %v778 = vadd.f32 %v765, %v776
  %v780 = vrot.slane %v765, 2
  %v782 = vadd.f32 %v765, %v780
  %v783 = vrot.slane %v765, 6
  %v785 = vadd.f32 %v765, %v783
  %v786 = vrot.slane %v767, 2
  %v788 = vadd.f32 %v765, %v786
  %v789 = vadd.f32 %v767, %v783
  %v790 = vadd.f32 %v767, %v786
  %791 = vrot.lane.b32.xlu0 %v765, 126
  %v792 = vpop.permute.xlu0 %791
  %v794 = vsel %vm454, %v792, 0.0
  %v795 = vrot.slane %v767, 6
  %v797 = vadd.f32 %v767, %v795
  %v799 = vrot.slane %v794, 2
  %v801 = vadd.f32 %v767, %v799
  %v803 = vrot.slane %v778, 1
  %v806 = vrot.slane %v782, 1
  %v809 = vrot.slane %v785, 3
  %v812 = vrot.slane %v788, 3
  %v815 = vrot.slane %v789, 5
  %v818 = vrot.slane %v790, 5
  %v821 = vrot.slane %v797, 7
  %v824 = vrot.slane %v801, 7
  %vm826 = vcmask 1040384
  %v827 = vsel %vm826, %v803, %v806
  %vm828 = vcmask 1041408
  %v829 = vsel %vm828, %v827, %v809
  %vm830 = vcmask 1042432
  %v831 = vsel %vm830, %v829, %v812
  %vm832 = vcmask 1043456
  %v833 = vsel %vm832, %v831, %v815
  %vm834 = vcmask 1044480
  %v835 = vsel %vm834, %v833, %v818
  %vm836 = vcmask 1045504
  %v837 = vsel %vm836, %v835, %v821
  %vm838 = vcmask 1046528
  %v839 = vsel %vm838, %v837, %v824
  %v840 = vtanh.pop %v839
  %v841 = vpack.c.bf16 %v840, %v840
  %v842 = vld [vmem:[%s11] sm:$0xf]
  %v843 = vld [vmem:[%s11 + $0x4] sm:$0xf]
  %v844 = vld [vmem:[%s11 + $0x8] sm:$0xf]
  %v845 = vld [vmem:[%s11 + $0xc] sm:$0xf]
  %s846 = scalar_lea.vmem %s11, 16
  %v847 = vld [vmem:[%s846] sm:$0xf]
  %v848 = vld [vmem:[%s846 + $0x4] sm:$0xf]
  %v849 = vld [vmem:[%s846 + $0x8] sm:$0xf]
  %v850 = vld [vmem:[%s846 + $0xc] sm:$0xf]
  %v855 = vunpack.c.l.b16 %v847
  %v856 = vunpack.c.l.b16 %v848
  %v857 = vunpack.c.l.b16 %v849
  %v858 = vunpack.c.l.b16 %v850
  %v859 = vpack.c.b16 %v856, %v855
  %v860 = vpack.c.b16 %v858, %v857
  %v862 = vunpack.c.l.b16 %v841
  %v863 = vpack.c.b16 %v862, %v862
  %864 = vrot.lane.b32.xlu0 %v863, 126
  %v865 = vpop.permute.xlu0 %864
  %vm866 = vcmask 64512
  %v868 = vsel %vm866, %v859, 0
  %v871 = vsel %vm866, %v860, 0
  %v874 = vsel %vm832, %v865, 0
  %876 = vmatpush.bf16.msra.mxu0 0
  %877 = vmatpush.bf16.msra.mxu0 0
  %878 = vmatpush.bf16.msra.mxu0 0
  %879 = vmatpush.bf16.msra.mxu0 0
  %880 = vmatpush.bf16.msra.mxu0 0
  %881 = vmatpush.bf16.msra.mxu0 0
  %882 = vmatpush.bf16.msra.mxu0 0
  %883 = vmatpush.bf16.msra.mxu0 %v874
  %884 = vmatmul.bf16.gmra.mxu0 %v868
  %v885 = vpop.f32.mrf.mxu0
  %v886 = vadd.f32 0.0, %v885
  %v887 = vpop.f32.mrf.mxu0
  %v888 = vadd.f32 0.0, %v887
  %889 = vmatmul.bf16.gmra.mxu0 %v871
  %v890 = vpop.f32.mrf.mxu0
  %v891 = vadd.f32 0.0, %v890
  %v892 = vpop.f32.mrf.mxu0
  %v893 = vadd.f32 0.0, %v892
  %894 = vdwg.mxu0
  %v899 = vunpack.c.l.b16 %v842
  %v900 = vunpack.c.l.b16 %v843
  %v901 = vunpack.c.l.b16 %v844
  %v902 = vunpack.c.l.b16 %v845
  %v903 = vpack.c.b16 %v900, %v899
  %v904 = vpack.c.b16 %v902, %v901
  %v906 = vsel %vm866, %v903, 0
  %v909 = vsel %vm866, %v904, 0
  %v912 = vsel %vm832, %v841, 0
  %914 = vmatpush.bf16.msra.mxu0 0
  %915 = vmatpush.bf16.msra.mxu0 0
  %916 = vmatpush.bf16.msra.mxu0 0
  %917 = vmatpush.bf16.msra.mxu0 0
  %918 = vmatpush.bf16.msra.mxu0 0
  %919 = vmatpush.bf16.msra.mxu0 0
  %920 = vmatpush.bf16.msra.mxu0 0
  %921 = vmatpush.bf16.msra.mxu0 %v912
  %922 = vmatmul.bf16.gmra.mxu0 %v906
  %v923 = vpop.f32.mrf.mxu0
  %v924 = vadd.f32 %v886, %v923
  %v925 = vpop.f32.mrf.mxu0
  %v926 = vadd.f32 %v888, %v925
  %927 = vmatmul.bf16.gmra.mxu0 %v909
  %v928 = vpop.f32.mrf.mxu0
  %v929 = vadd.f32 %v891, %v928
  %v930 = vpop.f32.mrf.mxu0
  %v931 = vadd.f32 %v893, %v930
  %932 = vdwg.mxu0
  %s933 = scalar_lea.vmem %s11, 32
  %v934 = vld [vmem:[%s933] sm:$0xf]
  %v935 = vld [vmem:[%s933 + $0x4] sm:$0xf]
  %v936 = vld [vmem:[%s933 + $0x8] sm:$0xf]
  %v937 = vld [vmem:[%s933 + $0xc] sm:$0xf]
  %v942 = vunpack.c.l.b16 %v934
  %v943 = vunpack.c.l.b16 %v935
  %v944 = vunpack.c.l.b16 %v936
  %v945 = vunpack.c.l.b16 %v937
  %v946 = vpack.c.b16 %v943, %v942
  %v947 = vpack.c.b16 %v945, %v944
  %948 = vrot.lane.b32.xlu0 %v863, 124
  %v949 = vpop.permute.xlu0 %948
  %v951 = vsel %vm866, %v946, 0
  %v954 = vsel %vm866, %v947, 0
  %v957 = vsel %vm832, %v949, 0
  %959 = vmatpush.bf16.msra.mxu0 0
  %960 = vmatpush.bf16.msra.mxu0 0
  %961 = vmatpush.bf16.msra.mxu0 0
  %962 = vmatpush.bf16.msra.mxu0 0
  %963 = vmatpush.bf16.msra.mxu0 0
  %964 = vmatpush.bf16.msra.mxu0 0
  %965 = vmatpush.bf16.msra.mxu0 0
  %966 = vmatpush.bf16.msra.mxu0 %v957
  %967 = vmatmul.bf16.gmra.mxu0 %v951
  %v968 = vpop.f32.mrf.mxu0
  %v969 = vadd.f32 0.0, %v968
  %v970 = vpop.f32.mrf.mxu0
  %v971 = vadd.f32 0.0, %v970
  %972 = vmatmul.bf16.gmra.mxu0 %v954
  %v973 = vpop.f32.mrf.mxu0
  %v974 = vadd.f32 0.0, %v973
  %v975 = vpop.f32.mrf.mxu0
  %v976 = vadd.f32 0.0, %v975
  %977 = vdwg.mxu0
  %v978 = vadd.f32 %v924, %v969
  %v979 = vadd.f32 %v926, %v971
  %v980 = vadd.f32 %v929, %v974
  %v981 = vadd.f32 %v931, %v976
  %s982 = scalar_lea.vmem %s11, 48
  %v983 = vld [vmem:[%s982] sm:$0xf]
  %v984 = vld [vmem:[%s982 + $0x4] sm:$0xf]
  %v985 = vld [vmem:[%s982 + $0x8] sm:$0xf]
  %v986 = vld [vmem:[%s982 + $0xc] sm:$0xf]
  %v991 = vunpack.c.l.b16 %v983
  %v992 = vunpack.c.l.b16 %v984
  %v993 = vunpack.c.l.b16 %v985
  %v994 = vunpack.c.l.b16 %v986
  %v995 = vpack.c.b16 %v992, %v991
  %v996 = vpack.c.b16 %v994, %v993
  %997 = vrot.lane.b32.xlu0 %v863, 122
  %v998 = vpop.permute.xlu0 %997
  %v1000 = vsel %vm866, %v995, 0
  %v1003 = vsel %vm866, %v996, 0
  %v1006 = vsel %vm832, %v998, 0
  %1008 = vmatpush.bf16.msra.mxu0 0
  %1009 = vmatpush.bf16.msra.mxu0 0
  %1010 = vmatpush.bf16.msra.mxu0 0
  %1011 = vmatpush.bf16.msra.mxu0 0
  %1012 = vmatpush.bf16.msra.mxu0 0
  %1013 = vmatpush.bf16.msra.mxu0 0
  %1014 = vmatpush.bf16.msra.mxu0 0
  %1015 = vmatpush.bf16.msra.mxu0 %v1006
  %1016 = vmatmul.bf16.gmra.mxu0 %v1000
  %v1017 = vpop.f32.mrf.mxu0
  %v1018 = vadd.f32 0.0, %v1017
  %v1019 = vpop.f32.mrf.mxu0
  %v1020 = vadd.f32 0.0, %v1019
  %1021 = vmatmul.bf16.gmra.mxu0 %v1003
  %v1022 = vpop.f32.mrf.mxu0
  %v1023 = vadd.f32 0.0, %v1022
  %v1024 = vpop.f32.mrf.mxu0
  %v1025 = vadd.f32 0.0, %v1024
  %1026 = vdwg.mxu0
  %v1027 = vadd.f32 %v978, %v1018
  %v1028 = vadd.f32 %v979, %v1020
  %v1029 = vadd.f32 %v980, %v1023
  %v1030 = vadd.f32 %v981, %v1025
  %s1031 = scalar_lea.vmem %s11, 64
  %v1032 = vld [vmem:[%s1031] sm:$0xf]
  %v1033 = vld [vmem:[%s1031 + $0x4] sm:$0xf]
  %v1034 = vld [vmem:[%s1031 + $0x8] sm:$0xf]
  %v1035 = vld [vmem:[%s1031 + $0xc] sm:$0xf]
  %v1040 = vunpack.c.l.b16 %v1032
  %v1041 = vunpack.c.l.b16 %v1033
  %v1042 = vunpack.c.l.b16 %v1034
  %v1043 = vunpack.c.l.b16 %v1035
  %v1044 = vpack.c.b16 %v1041, %v1040
  %v1045 = vpack.c.b16 %v1043, %v1042
  %1046 = vrot.lane.b32.xlu0 %v863, 120
  %v1047 = vpop.permute.xlu0 %1046
  %v1049 = vsel %vm866, %v1044, 0
  %v1052 = vsel %vm866, %v1045, 0
  %v1055 = vsel %vm832, %v1047, 0
  %1057 = vmatpush.bf16.msra.mxu0 0
  %1058 = vmatpush.bf16.msra.mxu0 0
  %1059 = vmatpush.bf16.msra.mxu0 0
  %1060 = vmatpush.bf16.msra.mxu0 0
  %1061 = vmatpush.bf16.msra.mxu0 0
  %1062 = vmatpush.bf16.msra.mxu0 0
  %1063 = vmatpush.bf16.msra.mxu0 0
  %1064 = vmatpush.bf16.msra.mxu0 %v1055
  %1065 = vmatmul.bf16.gmra.mxu0 %v1049
  %v1066 = vpop.f32.mrf.mxu0
  %v1067 = vadd.f32 0.0, %v1066
  %v1068 = vpop.f32.mrf.mxu0
  %v1069 = vadd.f32 0.0, %v1068
  %1070 = vmatmul.bf16.gmra.mxu0 %v1052
  %v1071 = vpop.f32.mrf.mxu0
  %v1072 = vadd.f32 0.0, %v1071
  %v1073 = vpop.f32.mrf.mxu0
  %v1074 = vadd.f32 0.0, %v1073
  %1075 = vdwg.mxu0
  %v1076 = vadd.f32 %v1027, %v1067
  %v1077 = vadd.f32 %v1028, %v1069
  %v1078 = vadd.f32 %v1029, %v1072
  %v1079 = vadd.f32 %v1030, %v1074
  %s1080 = scalar_lea.vmem %s11, 80
  %v1081 = vld [vmem:[%s1080] sm:$0xf]
  %v1082 = vld [vmem:[%s1080 + $0x4] sm:$0xf]
  %v1083 = vld [vmem:[%s1080 + $0x8] sm:$0xf]
  %v1084 = vld [vmem:[%s1080 + $0xc] sm:$0xf]
  %v1089 = vunpack.c.l.b16 %v1081
  %v1090 = vunpack.c.l.b16 %v1082
  %v1091 = vunpack.c.l.b16 %v1083
  %v1092 = vunpack.c.l.b16 %v1084
  %v1093 = vpack.c.b16 %v1090, %v1089
  %v1094 = vpack.c.b16 %v1092, %v1091
  %1095 = vrot.lane.b32.xlu0 %v863, 118
  %v1096 = vpop.permute.xlu0 %1095
  %v1098 = vsel %vm866, %v1093, 0
  %v1101 = vsel %vm866, %v1094, 0
  %v1104 = vsel %vm832, %v1096, 0
  %1106 = vmatpush.bf16.msra.mxu0 0
  %1107 = vmatpush.bf16.msra.mxu0 0
  %1108 = vmatpush.bf16.msra.mxu0 0
  %1109 = vmatpush.bf16.msra.mxu0 0
  %1110 = vmatpush.bf16.msra.mxu0 0
  %1111 = vmatpush.bf16.msra.mxu0 0
  %1112 = vmatpush.bf16.msra.mxu0 0
  %1113 = vmatpush.bf16.msra.mxu0 %v1104
  %1114 = vmatmul.bf16.gmra.mxu0 %v1098
  %v1115 = vpop.f32.mrf.mxu0
  %v1116 = vadd.f32 0.0, %v1115
  %v1117 = vpop.f32.mrf.mxu0
  %v1118 = vadd.f32 0.0, %v1117
  %1119 = vmatmul.bf16.gmra.mxu0 %v1101
  %v1120 = vpop.f32.mrf.mxu0
  %v1121 = vadd.f32 0.0, %v1120
  %v1122 = vpop.f32.mrf.mxu0
  %v1123 = vadd.f32 0.0, %v1122
  %1124 = vdwg.mxu0
  %v1125 = vadd.f32 %v1076, %v1116
  %v1126 = vadd.f32 %v1077, %v1118
  %v1127 = vadd.f32 %v1078, %v1121
  %v1128 = vadd.f32 %v1079, %v1123
  %s1129 = scalar_lea.vmem %s11, 96
  %v1130 = vld [vmem:[%s1129] sm:$0xf]
  %v1131 = vld [vmem:[%s1129 + $0x4] sm:$0xf]
  %v1132 = vld [vmem:[%s1129 + $0x8] sm:$0xf]
  %v1133 = vld [vmem:[%s1129 + $0xc] sm:$0xf]
  %v1138 = vunpack.c.l.b16 %v1130
  %v1139 = vunpack.c.l.b16 %v1131
  %v1140 = vunpack.c.l.b16 %v1132
  %v1141 = vunpack.c.l.b16 %v1133
  %v1142 = vpack.c.b16 %v1139, %v1138
  %v1143 = vpack.c.b16 %v1141, %v1140
  %1144 = vrot.lane.b32.xlu0 %v863, 116
  %v1145 = vpop.permute.xlu0 %1144
  %v1147 = vsel %vm866, %v1142, 0
  %v1150 = vsel %vm866, %v1143, 0
  %v1153 = vsel %vm832, %v1145, 0
  %1155 = vmatpush.bf16.msra.mxu0 0
  %1156 = vmatpush.bf16.msra.mxu0 0
  %1157 = vmatpush.bf16.msra.mxu0 0
  %1158 = vmatpush.bf16.msra.mxu0 0
  %1159 = vmatpush.bf16.msra.mxu0 0
  %1160 = vmatpush.bf16.msra.mxu0 0
  %1161 = vmatpush.bf16.msra.mxu0 0
  %1162 = vmatpush.bf16.msra.mxu0 %v1153
  %1163 = vmatmul.bf16.gmra.mxu0 %v1147
  %v1164 = vpop.f32.mrf.mxu0
  %v1165 = vadd.f32 0.0, %v1164
  %v1166 = vpop.f32.mrf.mxu0
  %v1167 = vadd.f32 0.0, %v1166
  %1168 = vmatmul.bf16.gmra.mxu0 %v1150
  %v1169 = vpop.f32.mrf.mxu0
  %v1170 = vadd.f32 0.0, %v1169
  %v1171 = vpop.f32.mrf.mxu0
  %v1172 = vadd.f32 0.0, %v1171
  %1173 = vdwg.mxu0
  %v1174 = vadd.f32 %v1125, %v1165
  %v1175 = vadd.f32 %v1126, %v1167
  %v1176 = vadd.f32 %v1127, %v1170
  %v1177 = vadd.f32 %v1128, %v1172
  %s1178 = scalar_lea.vmem %s11, 112
  %v1179 = vld [vmem:[%s1178] sm:$0xf]
  %v1180 = vld [vmem:[%s1178 + $0x4] sm:$0xf]
  %v1181 = vld [vmem:[%s1178 + $0x8] sm:$0xf]
  %v1182 = vld [vmem:[%s1178 + $0xc] sm:$0xf]
  %v1187 = vunpack.c.l.b16 %v1179
  %v1188 = vunpack.c.l.b16 %v1180
  %v1189 = vunpack.c.l.b16 %v1181
  %v1190 = vunpack.c.l.b16 %v1182
  %v1191 = vpack.c.b16 %v1188, %v1187
  %v1192 = vpack.c.b16 %v1190, %v1189
  %1193 = vrot.lane.b32.xlu0 %v863, 114
  %v1194 = vpop.permute.xlu0 %1193
  %v1196 = vsel %vm866, %v1191, 0
  %v1199 = vsel %vm866, %v1192, 0
  %v1202 = vsel %vm832, %v1194, 0
  %1204 = vmatpush.bf16.msra.mxu0 0
  %1205 = vmatpush.bf16.msra.mxu0 0
  %1206 = vmatpush.bf16.msra.mxu0 0
  %1207 = vmatpush.bf16.msra.mxu0 0
  %1208 = vmatpush.bf16.msra.mxu0 0
  %1209 = vmatpush.bf16.msra.mxu0 0
  %1210 = vmatpush.bf16.msra.mxu0 0
  %1211 = vmatpush.bf16.msra.mxu0 %v1202
  %1212 = vmatmul.bf16.gmra.mxu0 %v1196
  %v1213 = vpop.f32.mrf.mxu0
  %v1214 = vadd.f32 0.0, %v1213
  %v1215 = vpop.f32.mrf.mxu0
  %v1216 = vadd.f32 0.0, %v1215
  %1217 = vmatmul.bf16.gmra.mxu0 %v1199
  %v1218 = vpop.f32.mrf.mxu0
  %v1219 = vadd.f32 0.0, %v1218
  %v1220 = vpop.f32.mrf.mxu0
  %v1221 = vadd.f32 0.0, %v1220
  %1222 = vdwg.mxu0
  %v1223 = vadd.f32 %v1174, %v1214
  %v1224 = vadd.f32 %v1175, %v1216
  %v1225 = vadd.f32 %v1176, %v1219
  %v1226 = vadd.f32 %v1177, %v1221
  %s1227 = scalar_lea.vmem %s11, 128
  %v1228 = vld [vmem:[%s1227] sm:$0xf]
  %v1229 = vld [vmem:[%s1227 + $0x4] sm:$0xf]
  %v1230 = vld [vmem:[%s1227 + $0x8] sm:$0xf]
  %v1231 = vld [vmem:[%s1227 + $0xc] sm:$0xf]
  %v1236 = vunpack.c.l.b16 %v1228
  %v1237 = vunpack.c.l.b16 %v1229
  %v1238 = vunpack.c.l.b16 %v1230
  %v1239 = vunpack.c.l.b16 %v1231
  %v1240 = vpack.c.b16 %v1237, %v1236
  %v1241 = vpack.c.b16 %v1239, %v1238
  %1242 = vrot.lane.b32.xlu0 %v863, 112
  %v1243 = vpop.permute.xlu0 %1242
  %v1245 = vsel %vm866, %v1240, 0
  %v1248 = vsel %vm866, %v1241, 0
  %v1251 = vsel %vm832, %v1243, 0
  %1253 = vmatpush.bf16.msra.mxu0 0
  %1254 = vmatpush.bf16.msra.mxu0 0
  %1255 = vmatpush.bf16.msra.mxu0 0
  %1256 = vmatpush.bf16.msra.mxu0 0
  %1257 = vmatpush.bf16.msra.mxu0 0
  %1258 = vmatpush.bf16.msra.mxu0 0
  %1259 = vmatpush.bf16.msra.mxu0 0
  %1260 = vmatpush.bf16.msra.mxu0 %v1251
  %1261 = vmatmul.bf16.gmra.mxu0 %v1245
  %v1262 = vpop.f32.mrf.mxu0
  %v1263 = vadd.f32 0.0, %v1262
  %v1264 = vpop.f32.mrf.mxu0
  %v1265 = vadd.f32 0.0, %v1264
  %1266 = vmatmul.bf16.gmra.mxu0 %v1248
  %v1267 = vpop.f32.mrf.mxu0
  %v1268 = vadd.f32 0.0, %v1267
  %v1269 = vpop.f32.mrf.mxu0
  %v1270 = vadd.f32 0.0, %v1269
  %1271 = vdwg.mxu0
  %v1272 = vadd.f32 %v1223, %v1263
  %v1273 = vadd.f32 %v1224, %v1265
  %v1274 = vadd.f32 %v1225, %v1268
  %v1275 = vadd.f32 %v1226, %v1270
  %s1276 = scalar_lea.vmem %s11, 144
  %v1277 = vld [vmem:[%s1276] sm:$0xf]
  %v1278 = vld [vmem:[%s1276 + $0x4] sm:$0xf]
  %v1279 = vld [vmem:[%s1276 + $0x8] sm:$0xf]
  %v1280 = vld [vmem:[%s1276 + $0xc] sm:$0xf]
  %v1285 = vunpack.c.l.b16 %v1277
  %v1286 = vunpack.c.l.b16 %v1278
  %v1287 = vunpack.c.l.b16 %v1279
  %v1288 = vunpack.c.l.b16 %v1280
  %v1289 = vpack.c.b16 %v1286, %v1285
  %v1290 = vpack.c.b16 %v1288, %v1287
  %1291 = vrot.lane.b32.xlu0 %v863, 110
  %v1292 = vpop.permute.xlu0 %1291
  %v1294 = vsel %vm866, %v1289, 0
  %v1297 = vsel %vm866, %v1290, 0
  %v1300 = vsel %vm832, %v1292, 0
  %1302 = vmatpush.bf16.msra.mxu0 0
  %1303 = vmatpush.bf16.msra.mxu0 0
  %1304 = vmatpush.bf16.msra.mxu0 0
  %1305 = vmatpush.bf16.msra.mxu0 0
  %1306 = vmatpush.bf16.msra.mxu0 0
  %1307 = vmatpush.bf16.msra.mxu0 0
  %1308 = vmatpush.bf16.msra.mxu0 0
  %1309 = vmatpush.bf16.msra.mxu0 %v1300
  %1310 = vmatmul.bf16.gmra.mxu0 %v1294
  %v1311 = vpop.f32.mrf.mxu0
  %v1312 = vadd.f32 0.0, %v1311
  %v1313 = vpop.f32.mrf.mxu0
  %v1314 = vadd.f32 0.0, %v1313
  %1315 = vmatmul.bf16.gmra.mxu0 %v1297
  %v1316 = vpop.f32.mrf.mxu0
  %v1317 = vadd.f32 0.0, %v1316
  %v1318 = vpop.f32.mrf.mxu0
  %v1319 = vadd.f32 0.0, %v1318
  %1320 = vdwg.mxu0
  %v1321 = vadd.f32 %v1272, %v1312
  %v1322 = vadd.f32 %v1273, %v1314
  %v1323 = vadd.f32 %v1274, %v1317
  %v1324 = vadd.f32 %v1275, %v1319
  %v1325 = vld [vmem:[%s12] sm:$0xff]
  %v1326 = vld [vmem:[%s12 + $0x8] sm:$0xff]
  %v1327 = vld [vmem:[%s12 + $0x10] sm:$0xff]
  %v1328 = vld [vmem:[%s12 + $0x18] sm:$0xff]
  %1330 = vset.pattern.permute.xlu0 0
  %1331 = vperm.xlu0 %1330, %v1325
  %v1332 = vpop.permute.xlu0 %1331
  %1335 = vset.pattern.permute.xlu0 0
  %1336 = vperm.xlu0 %1335, %v1326
  %v1337 = vpop.permute.xlu0 %1336
  %1340 = vset.pattern.permute.xlu0 0
  %1341 = vperm.xlu0 %1340, %v1327
  %v1342 = vpop.permute.xlu0 %1341
  %1345 = vset.pattern.permute.xlu0 0
  %1346 = vperm.xlu0 %1345, %v1328
  %v1347 = vpop.permute.xlu0 %1346
  %v1349 = vadd.f32 %v1321, %v1332
  %v1350 = vadd.f32 %v1322, %v1337
  %v1351 = vadd.f32 %v1323, %v1342
  %v1352 = vadd.f32 %v1324, %v1347
  %1353 = vst.msk [vmem:[%s13] sm:$0xff] %vm443, %v1349
  %1354 = vst.msk [vmem:[%s13 + $0x8] sm:$0xff] %vm443, %v1350
  %1355 = vst.msk [vmem:[%s13 + $0x10] sm:$0xff] %vm443, %v1351
  %1356 = vst.msk [vmem:[%s13 + $0x18] sm:$0xff] %vm443, %v1352
  // Predicated region
  $region54: #{decoder_forward.1} parent=0 // pred_check
    _
  $region55: #{decoder_forward.1} parent=0 // pred_check_branch
    %1358 = sbr.rel (0) target = $region57
  $region56: #{decoder_forward.1} parent=0 // pred_region
    _
  $region57: #{decoder_forward.1} parent=0 // pred_fallthru
    _
  // Predicated region
  $region58: #{decoder_forward.1} parent=0 // pred_check
    _
  $region59: #{decoder_forward.1} parent=0 // pred_check_branch
    %1360 = sbr.rel (0) target = $region61
  $region60: #{decoder_forward.1} parent=0 // pred_region
    _
  $region61: #{decoder_forward.1} parent=0 // pred_fallthru
    _

</llo_original>
